<compile_context>
chip_gen: v6e
topology: v6e:2x2x1
jax: 0.10.0
libtpu: 0.0.40
codegen_flags: <defaults>
</compile_context>

<pallas_src>
import math

import jax
import jax.numpy as jnp
from jax import lax
from jax.experimental import pallas as pl
from jax.experimental.pallas import tpu as pltpu

_INV_SQRT2 = 0.7071067811865476


def _fused_conv_gelu_kernel(x_ref, w_ref, o_ref):
    # x_ref: (C_in+1, P)   zero-padded input slab + trailing all-ones row
    #                      (P = Hp*Wp covers the FULL padded output, border incl.)
    # w_ref: (C_out, C_in+1)  [ w2@w1 | w2@b1+b2 ]  (bias folded as last column)
    # o_ref: (C_out, P)       gelu(W_aug @ x_aug) == full padded output slab
    y = jnp.dot(
        w_ref[...],
        x_ref[...],
        preferred_element_type=jnp.float32,
        precision=lax.Precision.HIGHEST,
    )
    o_ref[...] = (0.5 * y) * (1.0 + lax.erf(y * _INV_SQRT2))


@jax.jit
def model_forward(x, w1, b1, w2, b2):
    """x: (1, 7, H, W) float32 NCHW.  Returns (1, 10, H+2, W+2) float32."""
    n, c_in, h, w = x.shape
    assert n == 1, "kernel written for batch=1 (matches the reference input)"
    c2 = w2.shape[0]
    hp, wp = h + 2, w + 2
    p = hp * wp

    hi = lax.Precision.HIGHEST

    # Fold the two 1x1 convolutions + both biases at trace time (10x8-sized math).
    w_fused = jnp.dot(w2, w1, precision=hi)                      # (10, 7)
    b_fused = jnp.dot(w2, b1, precision=hi) + b2                 # (10,)
    w_aug = jnp.concatenate([w_fused, b_fused[:, None]], axis=1)  # (10, 8)

    # Padded input slab with an all-ones 8th channel (carries the bias through
    # the matmul and makes border pixels come out as gelu(b_fused) for free).
    xp = jnp.pad(x.reshape(c_in, h, w), ((0, 0), (1, 1), (1, 1)))   # (7, 34, 34)
    ones = jnp.ones((1, hp, wp), x.dtype)
    x_aug = jnp.concatenate([xp, ones], axis=0).reshape(c_in + 1, p)  # (8, 1156)

    flops = 2 * c2 * (c_in + 1) * p + 4 * c2 * p
    bytes_accessed = 4 * ((c_in + 1) * p + c2 * (c_in + 1) + c2 * p)

    out_slab = pl.pallas_call(
        _fused_conv_gelu_kernel,
        out_shape=jax.ShapeDtypeStruct((c2, p), jnp.float32),
        in_specs=[
            pl.BlockSpec(memory_space=pltpu.MemorySpace.VMEM),  # x_aug slab
            pl.BlockSpec(memory_space=pltpu.MemorySpace.VMEM),  # fused [W | b]
        ],
        out_specs=pl.BlockSpec(memory_space=pltpu.MemorySpace.VMEM),
        cost_estimate=pl.CostEstimate(
            flops=flops, transcendentals=c2 * p, bytes_accessed=bytes_accessed),
    )(x_aug, w_aug)

    # Contiguous reshape only (no re-read / update-slice epilogue).
    return out_slab.reshape(c2, hp, wp)[None]                    # (1, 10, 34, 34)


def _reference(x, w1, b1, w2, b2):
    """Pure-JAX/XLA reference (unfused path) mirroring the PyTorch module."""
    hi = lax.Precision.HIGHEST
    xp = jnp.pad(x, ((0, 0), (0, 0), (1, 1), (1, 1)))
    v1 = jnp.einsum('oc,nchw->nohw', w1, xp, precision=hi) + b1[None, :, None, None]
    v2 = jnp.einsum('oc,nchw->nohw', w2, v1, precision=hi) + b2[None, :, None, None]
    return (0.5 * v2) * (1.0 + lax.erf(v2 * _INV_SQRT2))


def init_params(key):
    """Deterministic init mirroring the PyTorch layer shapes.
    conv:            weight (7, 7, 1, 1)  -> used as (7, 7), bias (7,)
    conv_transpose:  weight (7, 10, 1, 1) -> used as (10, 7), bias (10,)
    (If loading real PyTorch ConvTranspose2d weights, transpose (in,out,1,1) -> (out,in).)
    """
    k1, k2, k3, k4 = jax.random.split(key, 4)
    c_in, c1, c2 = 7, 7, 10

    bound1 = 1.0 / math.sqrt(c_in)
    w1 = jax.random.uniform(k1, (c1, c_in), jnp.float32, -bound1, bound1)
    b1 = jax.random.uniform(k2, (c1,), jnp.float32, -bound1, bound1)

    bound2 = 1.0 / math.sqrt(c1)
    w2 = jax.random.uniform(k3, (c2, c1), jnp.float32, -bound2, bound2)
    b2 = jax.random.uniform(k4, (c2,), jnp.float32, -bound2, bound2)
    return w1, b1, w2, b2


if __name__ == "__main__":
    key = jax.random.PRNGKey(0)
    k_x, k_p = jax.random.split(key)
    x = jax.random.normal(k_x, (1, 7, 32, 32), dtype=jnp.float32)
    w1, b1, w2, b2 = init_params(k_p)

    out = model_forward(x, w1, b1, w2, b2)
    out = jax.block_until_ready(out)

    assert out.shape == (1, 10, 34, 34), out.shape
    assert out.dtype == jnp.float32

    ref = _reference(x, w1, b1, w2, b2)
    assert jnp.allclose(out, ref, atol=1e-4, rtol=1e-4), float(jnp.max(jnp.abs(out - ref)))

    print("KERNEL_OK")
</pallas_src>

<mosaic_0001>
module attributes {stable_mosaic.version = 11 : i64} {
  func.func @_fused_conv_gelu_kernel(%arg0: memref<8x1156xf32, #tpu.memory_space<vmem>>, %arg1: memref<10x8xf32, #tpu.memory_space<vmem>>, %arg2: memref<10x1156xf32, #tpu.memory_space<vmem>>) attributes {dimension_semantics = [], scalar_prefetch = 0 : i64, scratch_operands = 0 : i64, tpu.core_type = #tpu.core_type<tc>} {
    %c0 = arith.constant 0 : index
    %c0_0 = arith.constant 0 : index
    %0 = vector.load %arg1[%c0, %c0_0] : memref<10x8xf32, #tpu.memory_space<vmem>>, vector<10x8xf32>
    %c0_1 = arith.constant 0 : index
    %c0_2 = arith.constant 0 : index
    %1 = vector.load %arg0[%c0_1, %c0_2] : memref<8x1156xf32, #tpu.memory_space<vmem>>, vector<8x1156xf32>
    %cst = arith.constant dense<0.000000e+00> : vector<10x1156xf32>
    %2 = tpu.matmul %0, %1, %cst {dimension_numbers = #tpu.dot_dimension_numbers<[1], [0], [0], [1], [0, 0, 1, 1], [], []>, precision = #tpu.contract_precision<fp32>} : vector<10x8xf32>, vector<8x1156xf32>, vector<10x1156xf32> -> vector<10x1156xf32>
    %cst_3 = arith.constant 5.000000e-01 : f32
    %3 = vector.broadcast %cst_3 : f32 to vector<10x1156xf32>
    %4 = arith.mulf %3, %2 : vector<10x1156xf32>
    %cst_4 = arith.constant 0.707106769 : f32
    %5 = vector.broadcast %cst_4 : f32 to vector<10x1156xf32>
    %6 = arith.mulf %2, %5 : vector<10x1156xf32>
    %7 = math.erf %6 : vector<10x1156xf32>
    %cst_5 = arith.constant 1.000000e+00 : f32
    %8 = vector.broadcast %cst_5 : f32 to vector<10x1156xf32>
    %9 = arith.addf %8, %7 : vector<10x1156xf32>
    %10 = arith.mulf %4, %9 : vector<10x1156xf32>
    %c0_6 = arith.constant 0 : index
    %c0_7 = arith.constant 0 : index
    %11 = vector.load %arg2[%c0_6, %c0_7] : memref<10x1156xf32, #tpu.memory_space<vmem>>, vector<10x1156xf32>
    tpu.vector_store %arg2[%c0_6, %c0_7], %10 {strides = array<i32>} : memref<10x1156xf32, #tpu.memory_space<vmem>>, vector<10x1156xf32>,
    return
  }
}

</mosaic_0001>

<llo_original>
// kernel: model_forward.1
$region0: #{model_forward.1}
  #allocation0 [shape = 'u32[]', space=smem, size = 0x4, offset = 0x4, fixed_abs, tag = 'smem constant byte address 0x4 - core index']
  #allocation1 [shape = 'u32[144,128]{1,0:T(1,128)}', space=vmem, size = 0x12000, scoped, tag = 'internal scratch']
  %s0 = inlined_call_operand.vmem [shape: f32[8,1156], index: 0, kind: input, shape index: {}]
  %s1 = inlined_call_operand.vmem [shape: f32[10,8], index: 1, kind: input, shape index: {}]
  %s2 = inlined_call_operand.vmem [shape: f32[10,1156], index: 2, kind: output, shape index: {}]
  %s3 = sld [smem:[#allocation0]]
  $region18: #{model_forward.1} parent=0
    _
  %s5 = ssub.s32 1, %s3
  %s6 = scalar_select 0, %s5, %s3
  // Predicated region
  $region2: #{model_forward.1} parent=0 // pred_check
    _
  $region3: #{model_forward.1} parent=0 // pred_check_branch
    %8 = sbr.rel (0) target = $region5
  $region4: #{model_forward.1} parent=0 // pred_region
    _
  $region5: #{model_forward.1} parent=0 // pred_fallthru
    _
  // Predicated region
  $region6: #{model_forward.1} parent=0 // pred_check
    _
  $region7: #{model_forward.1} parent=0 // pred_check_branch
    %10 = sbr.rel (0) target = $region9
  $region8: #{model_forward.1} parent=0 // pred_region
    _
  $region9: #{model_forward.1} parent=0 // pred_fallthru
    _
  %v11 = vld [vmem:[%s1] sm:$0xff]
  %v12 = vld [vmem:[%s1 + $0x8] sm:$0x3]
  %v13 = vld [vmem:[%s0] sm:$0xff]
  %v14 = vld [vmem:[%s0 + $0x8] sm:$0xff]
  %v15 = vld [vmem:[%s0 + $0x10] sm:$0xff]
  %v16 = vld [vmem:[%s0 + $0x18] sm:$0xff]
  %v17 = vld [vmem:[%s0 + $0x20] sm:$0xff]
  %v18 = vld [vmem:[%s0 + $0x28] sm:$0xff]
  %v19 = vld [vmem:[%s0 + $0x30] sm:$0xff]
  %v20 = vld [vmem:[%s0 + $0x38] sm:$0xff]
  %v21 = vld [vmem:[%s0 + $0x40] sm:$0xff]
  %v22 = vld [vmem:[%s0 + $0x48] sm:$0xff]
  %vm23 = vcmask 64512
  %v25 = vsel %vm23, %v11, 0
  %v28 = vsel %vm23, %v12, 0
  %30 = vmatprep.subr.mxu0 0.0
  %31 = vmatpush1.msra.mxu0 0.0
  %32 = vmatprep.subr.mxu0 0.0
  %33 = vmatpush1.msra.mxu0 0.0
  %34 = vmatprep.subr.mxu0 0.0
  %35 = vmatpush1.msra.mxu0 0.0
  %36 = vmatprep.subr.mxu0 0.0
  %37 = vmatpush1.msra.mxu0 0.0
  %38 = vmatprep.subr.mxu0 0.0
  %39 = vmatpush1.msra.mxu0 0.0
  %40 = vmatprep.subr.mxu0 0.0
  %41 = vmatpush1.msra.mxu0 0.0
  %42 = vmatprep.subr.mxu0 0.0
  %43 = vmatpush1.msra.mxu0 0.0
  %44 = vmatprep.subr.mxu0 0.0
  %45 = vmatpush1.msra.mxu0 0.0
  %46 = vmatprep.subr.mxu0 0.0
  %47 = vmatpush1.msra.mxu0 0.0
  %48 = vmatprep.subr.mxu0 0.0
  %49 = vmatpush1.msra.mxu0 0.0
  %50 = vmatprep.subr.mxu0 0.0
  %51 = vmatpush1.msra.mxu0 0.0
  %52 = vmatprep.subr.mxu0 0.0
  %53 = vmatpush1.msra.mxu0 0.0
  %54 = vmatprep.subr.mxu0 0.0
  %55 = vmatpush1.msra.mxu0 0.0
  %56 = vmatprep.subr.mxu0 0.0
  %57 = vmatpush1.msra.mxu0 0.0
  %58 = vmatprep.subr.mxu0 0.0
  %59 = vmatpush1.msra.mxu0 0.0
  %v60 = vand.u32 %v14, 4294901760
  %61 = vmatprep.subr.mxu0 %v60
  %v62 = vand.u32 %v13, 4294901760
  %63 = vmatpush1.msra.mxu0 %v62
  %64 = vmatprep.subr.mxu0 0.0
  %65 = vmatpush2.msra.mxu0 0.0
  %66 = vmatprep.subr.mxu0 0.0
  %67 = vmatpush2.msra.mxu0 0.0
  %68 = vmatprep.subr.mxu0 0.0
  %69 = vmatpush2.msra.mxu0 0.0
  %70 = vmatprep.subr.mxu0 0.0
  %71 = vmatpush2.msra.mxu0 0.0
  %72 = vmatprep.subr.mxu0 0.0
  %73 = vmatpush2.msra.mxu0 0.0
  %74 = vmatprep.subr.mxu0 0.0
  %75 = vmatpush2.msra.mxu0 0.0
  %76 = vmatprep.subr.mxu0 0.0
  %77 = vmatpush2.msra.mxu0 0.0
  %78 = vmatprep.subr.mxu0 0.0
  %79 = vmatpush2.msra.mxu0 0.0
  %80 = vmatprep.subr.mxu0 0.0
  %81 = vmatpush2.msra.mxu0 0.0
  %82 = vmatprep.subr.mxu0 0.0
  %83 = vmatpush2.msra.mxu0 0.0
  %84 = vmatprep.subr.mxu0 0.0
  %85 = vmatpush2.msra.mxu0 0.0
  %86 = vmatprep.subr.mxu0 0.0
  %87 = vmatpush2.msra.mxu0 0.0
  %88 = vmatprep.subr.mxu0 0.0
  %89 = vmatpush2.msra.mxu0 0.0
  %90 = vmatprep.subr.mxu0 0.0
  %91 = vmatpush2.msra.mxu0 0.0
  %92 = vmatprep.subr.mxu0 0.0
  %93 = vmatpush2.msra.mxu0 0.0
  %94 = vmatprep.subr.mxu0 0.0
  %95 = vmatpush2.msra.mxu0 0.0
  %96 = vmatprep.mubr.f32.mxu0 0.0
  %v97 = vand.u32 %v25, 4294901760
  %v98 = vsub.f32 %v25, %v97
  %v99 = vand.u32 %v98, 4294901760
  %v100 = vsub.f32 %v98, %v99
  %v101 = vand.u32 %v100, 4294901760
  %102 = vmatmul.mubr.f32.gmra.mxu0 %v101
  %v103 = vpop.f32.mrf.mxu0
  %v104 = vadd.f32 0.0, %v103
  %v105 = vpop.f32.mrf.mxu0
  %v106 = vadd.f32 0.0, %v105
  %107 = vmatprep.mubr.f32.mxu0 0.0
  %v108 = vand.u32 %v28, 4294901760
  %v109 = vsub.f32 %v28, %v108
  %v110 = vand.u32 %v109, 4294901760
  %v111 = vsub.f32 %v109, %v110
  %v112 = vand.u32 %v111, 4294901760
  %113 = vmatmul.mubr.f32.gmra.mxu0 %v112
  %v114 = vpop.f32.mrf.mxu0
  %v115 = vadd.f32 0.0, %v114
  %v116 = vpop.f32.mrf.mxu0
  %v117 = vadd.f32 0.0, %v116
  %118 = vdwg.mxu0
  %119 = vmatprep.subr.mxu0 0.0
  %120 = vmatpush1.msra.mxu0 0.0
  %121 = vmatprep.subr.mxu0 0.0
  %122 = vmatpush1.msra.mxu0 0.0
  %123 = vmatprep.subr.mxu0 0.0
  %124 = vmatpush1.msra.mxu0 0.0
  %125 = vmatprep.subr.mxu0 0.0
  %126 = vmatpush1.msra.mxu0 0.0
  %127 = vmatprep.subr.mxu0 0.0
  %128 = vmatpush1.msra.mxu0 0.0
  %129 = vmatprep.subr.mxu0 0.0
  %130 = vmatpush1.msra.mxu0 0.0
  %131 = vmatprep.subr.mxu0 0.0
  %132 = vmatpush1.msra.mxu0 0.0
  %133 = vmatprep.subr.mxu0 0.0
  %134 = vmatpush1.msra.mxu0 0.0
  %135 = vmatprep.subr.mxu0 0.0
  %136 = vmatpush1.msra.mxu0 0.0
  %137 = vmatprep.subr.mxu0 0.0
  %138 = vmatpush1.msra.mxu0 0.0
  %139 = vmatprep.subr.mxu0 0.0
  %140 = vmatpush1.msra.mxu0 0.0
  %141 = vmatprep.subr.mxu0 0.0
  %142 = vmatpush1.msra.mxu0 0.0
  %143 = vmatprep.subr.mxu0 0.0
  %144 = vmatpush1.msra.mxu0 0.0
  %145 = vmatprep.subr.mxu0 0.0
  %146 = vmatpush1.msra.mxu0 0.0
  %147 = vmatprep.subr.mxu0 0.0
  %148 = vmatpush1.msra.mxu0 0.0
  %v149 = vand.u32 %v14, 4294901760
  %v150 = vsub.f32 %v14, %v149
  %v151 = vand.u32 %v150, 4294901760
  %v152 = vsub.f32 %v150, %v151
  %v153 = vand.u32 %v152, 4294901760
  %154 = vmatprep.subr.mxu0 %v153
  %v155 = vand.u32 %v13, 4294901760
  %v156 = vsub.f32 %v13, %v155
  %v157 = vand.u32 %v156, 4294901760
  %v158 = vsub.f32 %v156, %v157
  %v159 = vand.u32 %v158, 4294901760
  %160 = vmatpush1.msra.mxu0 %v159
  %161 = vmatprep.subr.mxu0 0.0
  %162 = vmatpush2.msra.mxu0 0.0
  %163 = vmatprep.subr.mxu0 0.0
  %164 = vmatpush2.msra.mxu0 0.0
  %165 = vmatprep.subr.mxu0 0.0
  %166 = vmatpush2.msra.mxu0 0.0
  %167 = vmatprep.subr.mxu0 0.0
  %168 = vmatpush2.msra.mxu0 0.0
  %169 = vmatprep.subr.mxu0 0.0
  %170 = vmatpush2.msra.mxu0 0.0
  %171 = vmatprep.subr.mxu0 0.0
  %172 = vmatpush2.msra.mxu0 0.0
  %173 = vmatprep.subr.mxu0 0.0
  %174 = vmatpush2.msra.mxu0 0.0
  %175 = vmatprep.subr.mxu0 0.0
  %176 = vmatpush2.msra.mxu0 0.0
  %177 = vmatprep.subr.mxu0 0.0
  %178 = vmatpush2.msra.mxu0 0.0
  %179 = vmatprep.subr.mxu0 0.0
  %180 = vmatpush2.msra.mxu0 0.0
  %181 = vmatprep.subr.mxu0 0.0
  %182 = vmatpush2.msra.mxu0 0.0
  %183 = vmatprep.subr.mxu0 0.0
  %184 = vmatpush2.msra.mxu0 0.0
  %185 = vmatprep.subr.mxu0 0.0
  %186 = vmatpush2.msra.mxu0 0.0
  %187 = vmatprep.subr.mxu0 0.0
  %188 = vmatpush2.msra.mxu0 0.0
  %189 = vmatprep.subr.mxu0 0.0
  %190 = vmatpush2.msra.mxu0 0.0
  %191 = vmatprep.subr.mxu0 0.0
  %192 = vmatpush2.msra.mxu0 0.0
  %193 = vmatprep.mubr.f32.mxu0 0.0
  %v194 = vand.u32 %v25, 4294901760
  %195 = vmatmul.mubr.f32.gmra.mxu0 %v194
  %v196 = vpop.f32.mrf.mxu0
  %v197 = vadd.f32 %v104, %v196
  %v198 = vpop.f32.mrf.mxu0
  %v199 = vadd.f32 %v106, %v198
  %200 = vmatprep.mubr.f32.mxu0 0.0
  %v201 = vand.u32 %v28, 4294901760
  %202 = vmatmul.mubr.f32.gmra.mxu0 %v201
  %v203 = vpop.f32.mrf.mxu0
  %v204 = vadd.f32 %v115, %v203
  %v205 = vpop.f32.mrf.mxu0
  %v206 = vadd.f32 %v117, %v205
  %207 = vdwg.mxu0
  %208 = vmatprep.subr.mxu0 0.0
  %209 = vmatpush1.msra.mxu0 0.0
  %210 = vmatprep.subr.mxu0 0.0
  %211 = vmatpush1.msra.mxu0 0.0
  %212 = vmatprep.subr.mxu0 0.0
  %213 = vmatpush1.msra.mxu0 0.0
  %214 = vmatprep.subr.mxu0 0.0
  %215 = vmatpush1.msra.mxu0 0.0
  %216 = vmatprep.subr.mxu0 0.0
  %217 = vmatpush1.msra.mxu0 0.0
  %218 = vmatprep.subr.mxu0 0.0
  %219 = vmatpush1.msra.mxu0 0.0
  %220 = vmatprep.subr.mxu0 0.0
  %221 = vmatpush1.msra.mxu0 0.0
  %222 = vmatprep.subr.mxu0 0.0
  %223 = vmatpush1.msra.mxu0 0.0
  %224 = vmatprep.subr.mxu0 0.0
  %225 = vmatpush1.msra.mxu0 0.0
  %226 = vmatprep.subr.mxu0 0.0
  %227 = vmatpush1.msra.mxu0 0.0
  %228 = vmatprep.subr.mxu0 0.0
  %229 = vmatpush1.msra.mxu0 0.0
  %230 = vmatprep.subr.mxu0 0.0
  %231 = vmatpush1.msra.mxu0 0.0
  %232 = vmatprep.subr.mxu0 0.0
  %233 = vmatpush1.msra.mxu0 0.0
  %234 = vmatprep.subr.mxu0 0.0
  %235 = vmatpush1.msra.mxu0 0.0
  %236 = vmatprep.subr.mxu0 0.0
  %237 = vmatpush1.msra.mxu0 0.0
  %v238 = vand.u32 %v14, 4294901760
  %v239 = vsub.f32 %v14, %v238
  %240 = vmatprep.subr.mxu0 %v239
  %v241 = vand.u32 %v13, 4294901760
  %v242 = vsub.f32 %v13, %v241
  %243 = vmatpush1.msra.mxu0 %v242
  %244 = vmatprep.subr.mxu0 0.0
  %245 = vmatpush2.msra.mxu0 0.0
  %246 = vmatprep.subr.mxu0 0.0
  %247 = vmatpush2.msra.mxu0 0.0
  %248 = vmatprep.subr.mxu0 0.0
  %249 = vmatpush2.msra.mxu0 0.0
  %250 = vmatprep.subr.mxu0 0.0
  %251 = vmatpush2.msra.mxu0 0.0
  %252 = vmatprep.subr.mxu0 0.0
  %253 = vmatpush2.msra.mxu0 0.0
  %254 = vmatprep.subr.mxu0 0.0
  %255 = vmatpush2.msra.mxu0 0.0
  %256 = vmatprep.subr.mxu0 0.0
  %257 = vmatpush2.msra.mxu0 0.0
  %258 = vmatprep.subr.mxu0 0.0
  %259 = vmatpush2.msra.mxu0 0.0
  %260 = vmatprep.subr.mxu0 0.0
  %261 = vmatpush2.msra.mxu0 0.0
  %262 = vmatprep.subr.mxu0 0.0
  %263 = vmatpush2.msra.mxu0 0.0
  %264 = vmatprep.subr.mxu0 0.0
  %265 = vmatpush2.msra.mxu0 0.0
  %266 = vmatprep.subr.mxu0 0.0
  %267 = vmatpush2.msra.mxu0 0.0
  %268 = vmatprep.subr.mxu0 0.0
  %269 = vmatpush2.msra.mxu0 0.0
  %270 = vmatprep.subr.mxu0 0.0
  %271 = vmatpush2.msra.mxu0 0.0
  %272 = vmatprep.subr.mxu0 0.0
  %273 = vmatpush2.msra.mxu0 0.0
  %274 = vmatprep.subr.mxu0 0.0
  %275 = vmatpush2.msra.mxu0 0.0
  %276 = vmatprep.mubr.f32.mxu0 0.0
  %v277 = vand.u32 %v25, 4294901760
  %v278 = vsub.f32 %v25, %v277
  %279 = vmatmul.mubr.f32.gmra.mxu0 %v278
  %v280 = vpop.f32.mrf.mxu0
  %v281 = vadd.f32 %v197, %v280
  %v282 = vpop.f32.mrf.mxu0
  %v283 = vadd.f32 %v199, %v282
  %284 = vmatprep.mubr.f32.mxu0 0.0
  %v285 = vand.u32 %v28, 4294901760
  %v286 = vsub.f32 %v28, %v285
  %287 = vmatmul.mubr.f32.gmra.mxu0 %v286
  %v288 = vpop.f32.mrf.mxu0
  %v289 = vadd.f32 %v204, %v288
  %v290 = vpop.f32.mrf.mxu0
  %v291 = vadd.f32 %v206, %v290
  %292 = vdwg.mxu0
  %293 = vmatprep.subr.mxu0 0.0
  %294 = vmatpush1.msra.mxu0 0.0
  %295 = vmatprep.subr.mxu0 0.0
  %296 = vmatpush1.msra.mxu0 0.0
  %297 = vmatprep.subr.mxu0 0.0
  %298 = vmatpush1.msra.mxu0 0.0
  %299 = vmatprep.subr.mxu0 0.0
  %300 = vmatpush1.msra.mxu0 0.0
  %301 = vmatprep.subr.mxu0 0.0
  %302 = vmatpush1.msra.mxu0 0.0
  %303 = vmatprep.subr.mxu0 0.0
  %304 = vmatpush1.msra.mxu0 0.0
  %305 = vmatprep.subr.mxu0 0.0
  %306 = vmatpush1.msra.mxu0 0.0
  %307 = vmatprep.subr.mxu0 0.0
  %308 = vmatpush1.msra.mxu0 0.0
  %309 = vmatprep.subr.mxu0 0.0
  %310 = vmatpush1.msra.mxu0 0.0
  %311 = vmatprep.subr.mxu0 0.0
  %312 = vmatpush1.msra.mxu0 0.0
  %313 = vmatprep.subr.mxu0 0.0
  %314 = vmatpush1.msra.mxu0 0.0
  %315 = vmatprep.subr.mxu0 0.0
  %316 = vmatpush1.msra.mxu0 0.0
  %317 = vmatprep.subr.mxu0 0.0
  %318 = vmatpush1.msra.mxu0 0.0
  %319 = vmatprep.subr.mxu0 0.0
  %320 = vmatpush1.msra.mxu0 0.0
  %321 = vmatprep.subr.mxu0 0.0
  %322 = vmatpush1.msra.mxu0 0.0
  %v323 = vand.u32 %v14, 4294901760
  %324 = vmatprep.subr.mxu0 %v323
  %v325 = vand.u32 %v13, 4294901760
  %326 = vmatpush1.msra.mxu0 %v325
  %327 = vmatprep.subr.mxu0 0.0
  %328 = vmatpush2.msra.mxu0 0.0
  %329 = vmatprep.subr.mxu0 0.0
  %330 = vmatpush2.msra.mxu0 0.0
  %331 = vmatprep.subr.mxu0 0.0
  %332 = vmatpush2.msra.mxu0 0.0
  %333 = vmatprep.subr.mxu0 0.0
  %334 = vmatpush2.msra.mxu0 0.0
  %335 = vmatprep.subr.mxu0 0.0
  %336 = vmatpush2.msra.mxu0 0.0
  %337 = vmatprep.subr.mxu0 0.0
  %338 = vmatpush2.msra.mxu0 0.0
  %339 = vmatprep.subr.mxu0 0.0
  %340 = vmatpush2.msra.mxu0 0.0
  %341 = vmatprep.subr.mxu0 0.0
  %342 = vmatpush2.msra.mxu0 0.0
  %343 = vmatprep.subr.mxu0 0.0
  %344 = vmatpush2.msra.mxu0 0.0
  %345 = vmatprep.subr.mxu0 0.0
  %346 = vmatpush2.msra.mxu0 0.0
  %347 = vmatprep.subr.mxu0 0.0
  %348 = vmatpush2.msra.mxu0 0.0
  %349 = vmatprep.subr.mxu0 0.0
  %350 = vmatpush2.msra.mxu0 0.0
  %351 = vmatprep.subr.mxu0 0.0
  %352 = vmatpush2.msra.mxu0 0.0
  %353 = vmatprep.subr.mxu0 0.0
  %354 = vmatpush2.msra.mxu0 0.0
  %355 = vmatprep.subr.mxu0 0.0
  %356 = vmatpush2.msra.mxu0 0.0
  %357 = vmatprep.subr.mxu0 0.0
  %358 = vmatpush2.msra.mxu0 0.0
  %359 = vmatprep.mubr.f32.mxu0 0.0
  %v360 = vand.u32 %v25, 4294901760
  %v361 = vsub.f32 %v25, %v360
  %v362 = vand.u32 %v361, 4294901760
  %363 = vmatmul.mubr.f32.gmra.mxu0 %v362
  %v364 = vpop.f32.mrf.mxu0
  %v365 = vadd.f32 %v281, %v364
  %v366 = vpop.f32.mrf.mxu0
  %v367 = vadd.f32 %v283, %v366
  %368 = vmatprep.mubr.f32.mxu0 0.0
  %v369 = vand.u32 %v28, 4294901760
  %v370 = vsub.f32 %v28, %v369
  %v371 = vand.u32 %v370, 4294901760
  %372 = vmatmul.mubr.f32.gmra.mxu0 %v371
  %v373 = vpop.f32.mrf.mxu0
  %v374 = vadd.f32 %v289, %v373
  %v375 = vpop.f32.mrf.mxu0
  %v376 = vadd.f32 %v291, %v375
  %377 = vdwg.mxu0
  %378 = vmatprep.subr.mxu0 0.0
  %379 = vmatpush1.msra.mxu0 0.0
  %380 = vmatprep.subr.mxu0 0.0
  %381 = vmatpush1.msra.mxu0 0.0
  %382 = vmatprep.subr.mxu0 0.0
  %383 = vmatpush1.msra.mxu0 0.0
  %384 = vmatprep.subr.mxu0 0.0
  %385 = vmatpush1.msra.mxu0 0.0
  %386 = vmatprep.subr.mxu0 0.0
  %387 = vmatpush1.msra.mxu0 0.0
  %388 = vmatprep.subr.mxu0 0.0
  %389 = vmatpush1.msra.mxu0 0.0
  %390 = vmatprep.subr.mxu0 0.0
  %391 = vmatpush1.msra.mxu0 0.0
  %392 = vmatprep.subr.mxu0 0.0
  %393 = vmatpush1.msra.mxu0 0.0
  %394 = vmatprep.subr.mxu0 0.0
  %395 = vmatpush1.msra.mxu0 0.0
  %396 = vmatprep.subr.mxu0 0.0
  %397 = vmatpush1.msra.mxu0 0.0
  %398 = vmatprep.subr.mxu0 0.0
  %399 = vmatpush1.msra.mxu0 0.0
  %400 = vmatprep.subr.mxu0 0.0
  %401 = vmatpush1.msra.mxu0 0.0
  %402 = vmatprep.subr.mxu0 0.0
  %403 = vmatpush1.msra.mxu0 0.0
  %404 = vmatprep.subr.mxu0 0.0
  %405 = vmatpush1.msra.mxu0 0.0
  %406 = vmatprep.subr.mxu0 0.0
  %407 = vmatpush1.msra.mxu0 0.0
  %v408 = vand.u32 %v14, 4294901760
  %v409 = vsub.f32 %v14, %v408
  %v410 = vand.u32 %v409, 4294901760
  %411 = vmatprep.subr.mxu0 %v410
  %v412 = vand.u32 %v13, 4294901760
  %v413 = vsub.f32 %v13, %v412
  %v414 = vand.u32 %v413, 4294901760
  %415 = vmatpush1.msra.mxu0 %v414
  %416 = vmatprep.subr.mxu0 0.0
  %417 = vmatpush2.msra.mxu0 0.0
  %418 = vmatprep.subr.mxu0 0.0
  %419 = vmatpush2.msra.mxu0 0.0
  %420 = vmatprep.subr.mxu0 0.0
  %421 = vmatpush2.msra.mxu0 0.0
  %422 = vmatprep.subr.mxu0 0.0
  %423 = vmatpush2.msra.mxu0 0.0
  %424 = vmatprep.subr.mxu0 0.0
  %425 = vmatpush2.msra.mxu0 0.0
  %426 = vmatprep.subr.mxu0 0.0
  %427 = vmatpush2.msra.mxu0 0.0
  %428 = vmatprep.subr.mxu0 0.0
  %429 = vmatpush2.msra.mxu0 0.0
  %430 = vmatprep.subr.mxu0 0.0
  %431 = vmatpush2.msra.mxu0 0.0
  %432 = vmatprep.subr.mxu0 0.0
  %433 = vmatpush2.msra.mxu0 0.0
  %434 = vmatprep.subr.mxu0 0.0
  %435 = vmatpush2.msra.mxu0 0.0
  %436 = vmatprep.subr.mxu0 0.0
  %437 = vmatpush2.msra.mxu0 0.0
  %438 = vmatprep.subr.mxu0 0.0
  %439 = vmatpush2.msra.mxu0 0.0
  %440 = vmatprep.subr.mxu0 0.0
  %441 = vmatpush2.msra.mxu0 0.0
  %442 = vmatprep.subr.mxu0 0.0
  %443 = vmatpush2.msra.mxu0 0.0
  %444 = vmatprep.subr.mxu0 0.0
  %445 = vmatpush2.msra.mxu0 0.0
  %446 = vmatprep.subr.mxu0 0.0
  %447 = vmatpush2.msra.mxu0 0.0
  %448 = vmatprep.mubr.f32.mxu0 0.0
  %v449 = vand.u32 %v25, 4294901760
  %450 = vmatmul.mubr.f32.gmra.mxu0 %v449
  %v451 = vpop.f32.mrf.mxu0
  %v452 = vadd.f32 %v365, %v451
  %v453 = vpop.f32.mrf.mxu0
  %v454 = vadd.f32 %v367, %v453
  %455 = vmatprep.mubr.f32.mxu0 0.0
  %v456 = vand.u32 %v28, 4294901760
  %457 = vmatmul.mubr.f32.gmra.mxu0 %v456
  %v458 = vpop.f32.mrf.mxu0
  %v459 = vadd.f32 %v374, %v458
  %v460 = vpop.f32.mrf.mxu0
  %v461 = vadd.f32 %v376, %v460
  %462 = vdwg.mxu0
  %463 = vmatprep.subr.mxu0 0.0
  %464 = vmatpush1.msra.mxu0 0.0
  %465 = vmatprep.subr.mxu0 0.0
  %466 = vmatpush1.msra.mxu0 0.0
  %467 = vmatprep.subr.mxu0 0.0
  %468 = vmatpush1.msra.mxu0 0.0
  %469 = vmatprep.subr.mxu0 0.0
  %470 = vmatpush1.msra.mxu0 0.0
  %471 = vmatprep.subr.mxu0 0.0
  %472 = vmatpush1.msra.mxu0 0.0
  %473 = vmatprep.subr.mxu0 0.0
  %474 = vmatpush1.msra.mxu0 0.0
  %475 = vmatprep.subr.mxu0 0.0
  %476 = vmatpush1.msra.mxu0 0.0
  %477 = vmatprep.subr.mxu0 0.0
  %478 = vmatpush1.msra.mxu0 0.0
  %479 = vmatprep.subr.mxu0 0.0
  %480 = vmatpush1.msra.mxu0 0.0
  %481 = vmatprep.subr.mxu0 0.0
  %482 = vmatpush1.msra.mxu0 0.0
  %483 = vmatprep.subr.mxu0 0.0
  %484 = vmatpush1.msra.mxu0 0.0
  %485 = vmatprep.subr.mxu0 0.0
  %486 = vmatpush1.msra.mxu0 0.0
  %487 = vmatprep.subr.mxu0 0.0
  %488 = vmatpush1.msra.mxu0 0.0
  %489 = vmatprep.subr.mxu0 0.0
  %490 = vmatpush1.msra.mxu0 0.0
  %491 = vmatprep.subr.mxu0 0.0
  %492 = vmatpush1.msra.mxu0 0.0
  %v493 = vand.u32 %v14, 4294901760
  %494 = vmatprep.subr.mxu0 %v493
  %v495 = vand.u32 %v13, 4294901760
  %496 = vmatpush1.msra.mxu0 %v495
  %497 = vmatprep.subr.mxu0 0.0
  %498 = vmatpush2.msra.mxu0 0.0
  %499 = vmatprep.subr.mxu0 0.0
  %500 = vmatpush2.msra.mxu0 0.0
  %501 = vmatprep.subr.mxu0 0.0
  %502 = vmatpush2.msra.mxu0 0.0
  %503 = vmatprep.subr.mxu0 0.0
  %504 = vmatpush2.msra.mxu0 0.0
  %505 = vmatprep.subr.mxu0 0.0
  %506 = vmatpush2.msra.mxu0 0.0
  %507 = vmatprep.subr.mxu0 0.0
  %508 = vmatpush2.msra.mxu0 0.0
  %509 = vmatprep.subr.mxu0 0.0
  %510 = vmatpush2.msra.mxu0 0.0
  %511 = vmatprep.subr.mxu0 0.0
  %512 = vmatpush2.msra.mxu0 0.0
  %513 = vmatprep.subr.mxu0 0.0
  %514 = vmatpush2.msra.mxu0 0.0
  %515 = vmatprep.subr.mxu0 0.0
  %516 = vmatpush2.msra.mxu0 0.0
  %517 = vmatprep.subr.mxu0 0.0
  %518 = vmatpush2.msra.mxu0 0.0
  %519 = vmatprep.subr.mxu0 0.0
  %520 = vmatpush2.msra.mxu0 0.0
  %521 = vmatprep.subr.mxu0 0.0
  %522 = vmatpush2.msra.mxu0 0.0
  %523 = vmatprep.subr.mxu0 0.0
  %524 = vmatpush2.msra.mxu0 0.0
  %525 = vmatprep.subr.mxu0 0.0
  %526 = vmatpush2.msra.mxu0 0.0
  %527 = vmatprep.subr.mxu0 0.0
  %528 = vmatpush2.msra.mxu0 0.0
  %529 = vmatprep.mubr.f32.mxu0 0.0
  %v530 = vand.u32 %v25, 4294901760
  %531 = vmatmul.mubr.f32.gmra.mxu0 %v530
  %v532 = vpop.f32.mrf.mxu0
  %v533 = vadd.f32 %v452, %v532
  %v534 = vpop.f32.mrf.mxu0
  %v535 = vadd.f32 %v454, %v534
  %536 = vmatprep.mubr.f32.mxu0 0.0
  %v537 = vand.u32 %v28, 4294901760
  %538 = vmatmul.mubr.f32.gmra.mxu0 %v537
  %v539 = vpop.f32.mrf.mxu0
  %v540 = vadd.f32 %v459, %v539
  %v541 = vpop.f32.mrf.mxu0
  %v542 = vadd.f32 %v461, %v541
  %543 = vdwg.mxu0
  %544 = vmatprep.subr.mxu0 0.0
  %545 = vmatpush1.msra.mxu0 0.0
  %546 = vmatprep.subr.mxu0 0.0
  %547 = vmatpush1.msra.mxu0 0.0
  %548 = vmatprep.subr.mxu0 0.0
  %549 = vmatpush1.msra.mxu0 0.0
  %550 = vmatprep.subr.mxu0 0.0
  %551 = vmatpush1.msra.mxu0 0.0
  %552 = vmatprep.subr.mxu0 0.0
  %553 = vmatpush1.msra.mxu0 0.0
  %554 = vmatprep.subr.mxu0 0.0
  %555 = vmatpush1.msra.mxu0 0.0
  %556 = vmatprep.subr.mxu0 0.0
  %557 = vmatpush1.msra.mxu0 0.0
  %558 = vmatprep.subr.mxu0 0.0
  %559 = vmatpush1.msra.mxu0 0.0
  %560 = vmatprep.subr.mxu0 0.0
  %561 = vmatpush1.msra.mxu0 0.0
  %562 = vmatprep.subr.mxu0 0.0
  %563 = vmatpush1.msra.mxu0 0.0
  %564 = vmatprep.subr.mxu0 0.0
  %565 = vmatpush1.msra.mxu0 0.0
  %566 = vmatprep.subr.mxu0 0.0
  %567 = vmatpush1.msra.mxu0 0.0
  %568 = vmatprep.subr.mxu0 0.0
  %569 = vmatpush1.msra.mxu0 0.0
  %570 = vmatprep.subr.mxu0 0.0
  %571 = vmatpush1.msra.mxu0 0.0
  %572 = vmatprep.subr.mxu0 0.0
  %573 = vmatpush1.msra.mxu0 0.0
  %v574 = vand.u32 %v16, 4294901760
  %575 = vmatprep.subr.mxu0 %v574
  %v576 = vand.u32 %v15, 4294901760
  %577 = vmatpush1.msra.mxu0 %v576
  %578 = vmatprep.subr.mxu0 0.0
  %579 = vmatpush2.msra.mxu0 0.0
  %580 = vmatprep.subr.mxu0 0.0
  %581 = vmatpush2.msra.mxu0 0.0
  %582 = vmatprep.subr.mxu0 0.0
  %583 = vmatpush2.msra.mxu0 0.0
  %584 = vmatprep.subr.mxu0 0.0
  %585 = vmatpush2.msra.mxu0 0.0
  %586 = vmatprep.subr.mxu0 0.0
  %587 = vmatpush2.msra.mxu0 0.0
  %588 = vmatprep.subr.mxu0 0.0
  %589 = vmatpush2.msra.mxu0 0.0
  %590 = vmatprep.subr.mxu0 0.0
  %591 = vmatpush2.msra.mxu0 0.0
  %592 = vmatprep.subr.mxu0 0.0
  %593 = vmatpush2.msra.mxu0 0.0
  %594 = vmatprep.subr.mxu0 0.0
  %595 = vmatpush2.msra.mxu0 0.0
  %596 = vmatprep.subr.mxu0 0.0
  %597 = vmatpush2.msra.mxu0 0.0
  %598 = vmatprep.subr.mxu0 0.0
  %599 = vmatpush2.msra.mxu0 0.0
  %600 = vmatprep.subr.mxu0 0.0
  %601 = vmatpush2.msra.mxu0 0.0
  %602 = vmatprep.subr.mxu0 0.0
  %603 = vmatpush2.msra.mxu0 0.0
  %604 = vmatprep.subr.mxu0 0.0
  %605 = vmatpush2.msra.mxu0 0.0
  %606 = vmatprep.subr.mxu0 0.0
  %607 = vmatpush2.msra.mxu0 0.0
  %608 = vmatprep.subr.mxu0 0.0
  %609 = vmatpush2.msra.mxu0 0.0
  %610 = vmatprep.mubr.f32.mxu0 0.0
  %v611 = vand.u32 %v25, 4294901760
  %v612 = vsub.f32 %v25, %v611
  %v613 = vand.u32 %v612, 4294901760
  %v614 = vsub.f32 %v612, %v613
  %v615 = vand.u32 %v614, 4294901760
  %616 = vmatmul.mubr.f32.gmra.mxu0 %v615
  %v617 = vpop.f32.mrf.mxu0
  %v618 = vadd.f32 0.0, %v617
  %v619 = vpop.f32.mrf.mxu0
  %v620 = vadd.f32 0.0, %v619
  %621 = vmatprep.mubr.f32.mxu0 0.0
  %v622 = vand.u32 %v28, 4294901760
  %v623 = vsub.f32 %v28, %v622
  %v624 = vand.u32 %v623, 4294901760
  %v625 = vsub.f32 %v623, %v624
  %v626 = vand.u32 %v625, 4294901760
  %627 = vmatmul.mubr.f32.gmra.mxu0 %v626
  %v628 = vpop.f32.mrf.mxu0
  %v629 = vadd.f32 0.0, %v628
  %v630 = vpop.f32.mrf.mxu0
  %v631 = vadd.f32 0.0, %v630
  %632 = vdwg.mxu0
  %633 = vmatprep.subr.mxu0 0.0
  %634 = vmatpush1.msra.mxu0 0.0
  %635 = vmatprep.subr.mxu0 0.0
  %636 = vmatpush1.msra.mxu0 0.0
  %637 = vmatprep.subr.mxu0 0.0
  %638 = vmatpush1.msra.mxu0 0.0
  %639 = vmatprep.subr.mxu0 0.0
  %640 = vmatpush1.msra.mxu0 0.0
  %641 = vmatprep.subr.mxu0 0.0
  %642 = vmatpush1.msra.mxu0 0.0
  %643 = vmatprep.subr.mxu0 0.0
  %644 = vmatpush1.msra.mxu0 0.0
  %645 = vmatprep.subr.mxu0 0.0
  %646 = vmatpush1.msra.mxu0 0.0
  %647 = vmatprep.subr.mxu0 0.0
  %648 = vmatpush1.msra.mxu0 0.0
  %649 = vmatprep.subr.mxu0 0.0
  %650 = vmatpush1.msra.mxu0 0.0
  %651 = vmatprep.subr.mxu0 0.0
  %652 = vmatpush1.msra.mxu0 0.0
  %653 = vmatprep.subr.mxu0 0.0
  %654 = vmatpush1.msra.mxu0 0.0
  %655 = vmatprep.subr.mxu0 0.0
  %656 = vmatpush1.msra.mxu0 0.0
  %657 = vmatprep.subr.mxu0 0.0
  %658 = vmatpush1.msra.mxu0 0.0
  %659 = vmatprep.subr.mxu0 0.0
  %660 = vmatpush1.msra.mxu0 0.0
  %661 = vmatprep.subr.mxu0 0.0
  %662 = vmatpush1.msra.mxu0 0.0
  %v663 = vand.u32 %v16, 4294901760
  %v664 = vsub.f32 %v16, %v663
  %v665 = vand.u32 %v664, 4294901760
  %v666 = vsub.f32 %v664, %v665
  %v667 = vand.u32 %v666, 4294901760
  %668 = vmatprep.subr.mxu0 %v667
  %v669 = vand.u32 %v15, 4294901760
  %v670 = vsub.f32 %v15, %v669
  %v671 = vand.u32 %v670, 4294901760
  %v672 = vsub.f32 %v670, %v671
  %v673 = vand.u32 %v672, 4294901760
  %674 = vmatpush1.msra.mxu0 %v673
  %675 = vmatprep.subr.mxu0 0.0
  %676 = vmatpush2.msra.mxu0 0.0
  %677 = vmatprep.subr.mxu0 0.0
  %678 = vmatpush2.msra.mxu0 0.0
  %679 = vmatprep.subr.mxu0 0.0
  %680 = vmatpush2.msra.mxu0 0.0
  %681 = vmatprep.subr.mxu0 0.0
  %682 = vmatpush2.msra.mxu0 0.0
  %683 = vmatprep.subr.mxu0 0.0
  %684 = vmatpush2.msra.mxu0 0.0
  %685 = vmatprep.subr.mxu0 0.0
  %686 = vmatpush2.msra.mxu0 0.0
  %687 = vmatprep.subr.mxu0 0.0
  %688 = vmatpush2.msra.mxu0 0.0
  %689 = vmatprep.subr.mxu0 0.0
  %690 = vmatpush2.msra.mxu0 0.0
  %691 = vmatprep.subr.mxu0 0.0
  %692 = vmatpush2.msra.mxu0 0.0
  %693 = vmatprep.subr.mxu0 0.0
  %694 = vmatpush2.msra.mxu0 0.0
  %695 = vmatprep.subr.mxu0 0.0
  %696 = vmatpush2.msra.mxu0 0.0
  %697 = vmatprep.subr.mxu0 0.0
  %698 = vmatpush2.msra.mxu0 0.0
  %699 = vmatprep.subr.mxu0 0.0
  %700 = vmatpush2.msra.mxu0 0.0
  %701 = vmatprep.subr.mxu0 0.0
  %702 = vmatpush2.msra.mxu0 0.0
  %703 = vmatprep.subr.mxu0 0.0
  %704 = vmatpush2.msra.mxu0 0.0
  %705 = vmatprep.subr.mxu0 0.0
  %706 = vmatpush2.msra.mxu0 0.0
  %707 = vmatprep.mubr.f32.mxu0 0.0
  %v708 = vand.u32 %v25, 4294901760
  %709 = vmatmul.mubr.f32.gmra.mxu0 %v708
  %v710 = vpop.f32.mrf.mxu0
  %v711 = vadd.f32 %v618, %v710
  %v712 = vpop.f32.mrf.mxu0
  %v713 = vadd.f32 %v620, %v712
  %714 = vmatprep.mubr.f32.mxu0 0.0
  %v715 = vand.u32 %v28, 4294901760
  %716 = vmatmul.mubr.f32.gmra.mxu0 %v715
  %v717 = vpop.f32.mrf.mxu0
  %v718 = vadd.f32 %v629, %v717
  %v719 = vpop.f32.mrf.mxu0
  %v720 = vadd.f32 %v631, %v719
  %721 = vdwg.mxu0
  %722 = vmatprep.subr.mxu0 0.0
  %723 = vmatpush1.msra.mxu0 0.0
  %724 = vmatprep.subr.mxu0 0.0
  %725 = vmatpush1.msra.mxu0 0.0
  %726 = vmatprep.subr.mxu0 0.0
  %727 = vmatpush1.msra.mxu0 0.0
  %728 = vmatprep.subr.mxu0 0.0
  %729 = vmatpush1.msra.mxu0 0.0
  %730 = vmatprep.subr.mxu0 0.0
  %731 = vmatpush1.msra.mxu0 0.0
  %732 = vmatprep.subr.mxu0 0.0
  %733 = vmatpush1.msra.mxu0 0.0
  %734 = vmatprep.subr.mxu0 0.0
  %735 = vmatpush1.msra.mxu0 0.0
  %736 = vmatprep.subr.mxu0 0.0
  %737 = vmatpush1.msra.mxu0 0.0
  %738 = vmatprep.subr.mxu0 0.0
  %739 = vmatpush1.msra.mxu0 0.0
  %740 = vmatprep.subr.mxu0 0.0
  %741 = vmatpush1.msra.mxu0 0.0
  %742 = vmatprep.subr.mxu0 0.0
  %743 = vmatpush1.msra.mxu0 0.0
  %744 = vmatprep.subr.mxu0 0.0
  %745 = vmatpush1.msra.mxu0 0.0
  %746 = vmatprep.subr.mxu0 0.0
  %747 = vmatpush1.msra.mxu0 0.0
  %748 = vmatprep.subr.mxu0 0.0
  %749 = vmatpush1.msra.mxu0 0.0
  %750 = vmatprep.subr.mxu0 0.0
  %751 = vmatpush1.msra.mxu0 0.0
  %v752 = vand.u32 %v16, 4294901760
  %v753 = vsub.f32 %v16, %v752
  %754 = vmatprep.subr.mxu0 %v753
  %v755 = vand.u32 %v15, 4294901760
  %v756 = vsub.f32 %v15, %v755
  %757 = vmatpush1.msra.mxu0 %v756
  %758 = vmatprep.subr.mxu0 0.0
  %759 = vmatpush2.msra.mxu0 0.0
  %760 = vmatprep.subr.mxu0 0.0
  %761 = vmatpush2.msra.mxu0 0.0
  %762 = vmatprep.subr.mxu0 0.0
  %763 = vmatpush2.msra.mxu0 0.0
  %764 = vmatprep.subr.mxu0 0.0
  %765 = vmatpush2.msra.mxu0 0.0
  %766 = vmatprep.subr.mxu0 0.0
  %767 = vmatpush2.msra.mxu0 0.0
  %768 = vmatprep.subr.mxu0 0.0
  %769 = vmatpush2.msra.mxu0 0.0
  %770 = vmatprep.subr.mxu0 0.0
  %771 = vmatpush2.msra.mxu0 0.0
  %772 = vmatprep.subr.mxu0 0.0
  %773 = vmatpush2.msra.mxu0 0.0
  %774 = vmatprep.subr.mxu0 0.0
  %775 = vmatpush2.msra.mxu0 0.0
  %776 = vmatprep.subr.mxu0 0.0
  %777 = vmatpush2.msra.mxu0 0.0
  %778 = vmatprep.subr.mxu0 0.0
  %779 = vmatpush2.msra.mxu0 0.0
  %780 = vmatprep.subr.mxu0 0.0
  %781 = vmatpush2.msra.mxu0 0.0
  %782 = vmatprep.subr.mxu0 0.0
  %783 = vmatpush2.msra.mxu0 0.0
  %784 = vmatprep.subr.mxu0 0.0
  %785 = vmatpush2.msra.mxu0 0.0
  %786 = vmatprep.subr.mxu0 0.0
  %787 = vmatpush2.msra.mxu0 0.0
  %788 = vmatprep.subr.mxu0 0.0
  %789 = vmatpush2.msra.mxu0 0.0
  %790 = vmatprep.mubr.f32.mxu0 0.0
  %v791 = vand.u32 %v25, 4294901760
  %v792 = vsub.f32 %v25, %v791
  %793 = vmatmul.mubr.f32.gmra.mxu0 %v792
  %v794 = vpop.f32.mrf.mxu0
  %v795 = vadd.f32 %v711, %v794
  %v796 = vpop.f32.mrf.mxu0
  %v797 = vadd.f32 %v713, %v796
  %798 = vmatprep.mubr.f32.mxu0 0.0
  %v799 = vand.u32 %v28, 4294901760
  %v800 = vsub.f32 %v28, %v799
  %801 = vmatmul.mubr.f32.gmra.mxu0 %v800
  %v802 = vpop.f32.mrf.mxu0
  %v803 = vadd.f32 %v718, %v802
  %v804 = vpop.f32.mrf.mxu0
  %v805 = vadd.f32 %v720, %v804
  %806 = vdwg.mxu0
  %807 = vmatprep.subr.mxu0 0.0
  %808 = vmatpush1.msra.mxu0 0.0
  %809 = vmatprep.subr.mxu0 0.0
  %810 = vmatpush1.msra.mxu0 0.0
  %811 = vmatprep.subr.mxu0 0.0
  %812 = vmatpush1.msra.mxu0 0.0
  %813 = vmatprep.subr.mxu0 0.0
  %814 = vmatpush1.msra.mxu0 0.0
  %815 = vmatprep.subr.mxu0 0.0
  %816 = vmatpush1.msra.mxu0 0.0
  %817 = vmatprep.subr.mxu0 0.0
  %818 = vmatpush1.msra.mxu0 0.0
  %819 = vmatprep.subr.mxu0 0.0
  %820 = vmatpush1.msra.mxu0 0.0
  %821 = vmatprep.subr.mxu0 0.0
  %822 = vmatpush1.msra.mxu0 0.0
  %823 = vmatprep.subr.mxu0 0.0
  %824 = vmatpush1.msra.mxu0 0.0
  %825 = vmatprep.subr.mxu0 0.0
  %826 = vmatpush1.msra.mxu0 0.0
  %827 = vmatprep.subr.mxu0 0.0
  %828 = vmatpush1.msra.mxu0 0.0
  %829 = vmatprep.subr.mxu0 0.0
  %830 = vmatpush1.msra.mxu0 0.0
  %831 = vmatprep.subr.mxu0 0.0
  %832 = vmatpush1.msra.mxu0 0.0
  %833 = vmatprep.subr.mxu0 0.0
  %834 = vmatpush1.msra.mxu0 0.0
  %835 = vmatprep.subr.mxu0 0.0
  %836 = vmatpush1.msra.mxu0 0.0
  %v837 = vand.u32 %v16, 4294901760
  %838 = vmatprep.subr.mxu0 %v837
  %v839 = vand.u32 %v15, 4294901760
  %840 = vmatpush1.msra.mxu0 %v839
  %841 = vmatprep.subr.mxu0 0.0
  %842 = vmatpush2.msra.mxu0 0.0
  %843 = vmatprep.subr.mxu0 0.0
  %844 = vmatpush2.msra.mxu0 0.0
  %845 = vmatprep.subr.mxu0 0.0
  %846 = vmatpush2.msra.mxu0 0.0
  %847 = vmatprep.subr.mxu0 0.0
  %848 = vmatpush2.msra.mxu0 0.0
  %849 = vmatprep.subr.mxu0 0.0
  %850 = vmatpush2.msra.mxu0 0.0
  %851 = vmatprep.subr.mxu0 0.0
  %852 = vmatpush2.msra.mxu0 0.0
  %853 = vmatprep.subr.mxu0 0.0
  %854 = vmatpush2.msra.mxu0 0.0
  %855 = vmatprep.subr.mxu0 0.0
  %856 = vmatpush2.msra.mxu0 0.0
  %857 = vmatprep.subr.mxu0 0.0
  %858 = vmatpush2.msra.mxu0 0.0
  %859 = vmatprep.subr.mxu0 0.0
  %860 = vmatpush2.msra.mxu0 0.0
  %861 = vmatprep.subr.mxu0 0.0
  %862 = vmatpush2.msra.mxu0 0.0
  %863 = vmatprep.subr.mxu0 0.0
  %864 = vmatpush2.msra.mxu0 0.0
  %865 = vmatprep.subr.mxu0 0.0
  %866 = vmatpush2.msra.mxu0 0.0
  %867 = vmatprep.subr.mxu0 0.0
  %868 = vmatpush2.msra.mxu0 0.0
  %869 = vmatprep.subr.mxu0 0.0
  %870 = vmatpush2.msra.mxu0 0.0
  %871 = vmatprep.subr.mxu0 0.0
  %872 = vmatpush2.msra.mxu0 0.0
  %873 = vmatprep.mubr.f32.mxu0 0.0
  %v874 = vand.u32 %v25, 4294901760
  %v875 = vsub.f32 %v25, %v874
  %v876 = vand.u32 %v875, 4294901760
  %877 = vmatmul.mubr.f32.gmra.mxu0 %v876
  %v878 = vpop.f32.mrf.mxu0
  %v879 = vadd.f32 %v795, %v878
  %v880 = vpop.f32.mrf.mxu0
  %v881 = vadd.f32 %v797, %v880
  %882 = vmatprep.mubr.f32.mxu0 0.0
  %v883 = vand.u32 %v28, 4294901760
  %v884 = vsub.f32 %v28, %v883
  %v885 = vand.u32 %v884, 4294901760
  %886 = vmatmul.mubr.f32.gmra.mxu0 %v885
  %v887 = vpop.f32.mrf.mxu0
  %v888 = vadd.f32 %v803, %v887
  %v889 = vpop.f32.mrf.mxu0
  %v890 = vadd.f32 %v805, %v889
  %891 = vdwg.mxu0
  %892 = vmatprep.subr.mxu0 0.0
  %893 = vmatpush1.msra.mxu0 0.0
  %894 = vmatprep.subr.mxu0 0.0
  %895 = vmatpush1.msra.mxu0 0.0
  %896 = vmatprep.subr.mxu0 0.0
  %897 = vmatpush1.msra.mxu0 0.0
  %898 = vmatprep.subr.mxu0 0.0
  %899 = vmatpush1.msra.mxu0 0.0
  %900 = vmatprep.subr.mxu0 0.0
  %901 = vmatpush1.msra.mxu0 0.0
  %902 = vmatprep.subr.mxu0 0.0
  %903 = vmatpush1.msra.mxu0 0.0
  %904 = vmatprep.subr.mxu0 0.0
  %905 = vmatpush1.msra.mxu0 0.0
  %906 = vmatprep.subr.mxu0 0.0
  %907 = vmatpush1.msra.mxu0 0.0
  %908 = vmatprep.subr.mxu0 0.0
  %909 = vmatpush1.msra.mxu0 0.0
  %910 = vmatprep.subr.mxu0 0.0
  %911 = vmatpush1.msra.mxu0 0.0
  %912 = vmatprep.subr.mxu0 0.0
  %913 = vmatpush1.msra.mxu0 0.0
  %914 = vmatprep.subr.mxu0 0.0
  %915 = vmatpush1.msra.mxu0 0.0
  %916 = vmatprep.subr.mxu0 0.0
  %917 = vmatpush1.msra.mxu0 0.0
  %918 = vmatprep.subr.mxu0 0.0
  %919 = vmatpush1.msra.mxu0 0.0
  %920 = vmatprep.subr.mxu0 0.0
  %921 = vmatpush1.msra.mxu0 0.0
  %v922 = vand.u32 %v16, 4294901760
  %v923 = vsub.f32 %v16, %v922
  %v924 = vand.u32 %v923, 4294901760
  %925 = vmatprep.subr.mxu0 %v924
  %v926 = vand.u32 %v15, 4294901760
  %v927 = vsub.f32 %v15, %v926
  %v928 = vand.u32 %v927, 4294901760
  %929 = vmatpush1.msra.mxu0 %v928
  %930 = vmatprep.subr.mxu0 0.0
  %931 = vmatpush2.msra.mxu0 0.0
  %932 = vmatprep.subr.mxu0 0.0
  %933 = vmatpush2.msra.mxu0 0.0
  %934 = vmatprep.subr.mxu0 0.0
  %935 = vmatpush2.msra.mxu0 0.0
  %936 = vmatprep.subr.mxu0 0.0
  %937 = vmatpush2.msra.mxu0 0.0
  %938 = vmatprep.subr.mxu0 0.0
  %939 = vmatpush2.msra.mxu0 0.0
  %940 = vmatprep.subr.mxu0 0.0
  %941 = vmatpush2.msra.mxu0 0.0
  %942 = vmatprep.subr.mxu0 0.0
  %943 = vmatpush2.msra.mxu0 0.0
  %944 = vmatprep.subr.mxu0 0.0
  %945 = vmatpush2.msra.mxu0 0.0
  %946 = vmatprep.subr.mxu0 0.0
  %947 = vmatpush2.msra.mxu0 0.0
  %948 = vmatprep.subr.mxu0 0.0
  %949 = vmatpush2.msra.mxu0 0.0
  %950 = vmatprep.subr.mxu0 0.0
  %951 = vmatpush2.msra.mxu0 0.0
  %952 = vmatprep.subr.mxu0 0.0
  %953 = vmatpush2.msra.mxu0 0.0
  %954 = vmatprep.subr.mxu0 0.0
  %955 = vmatpush2.msra.mxu0 0.0
  %956 = vmatprep.subr.mxu0 0.0
  %957 = vmatpush2.msra.mxu0 0.0
  %958 = vmatprep.subr.mxu0 0.0
  %959 = vmatpush2.msra.mxu0 0.0
  %960 = vmatprep.subr.mxu0 0.0
  %961 = vmatpush2.msra.mxu0 0.0
  %962 = vmatprep.mubr.f32.mxu0 0.0
  %v963 = vand.u32 %v25, 4294901760
  %964 = vmatmul.mubr.f32.gmra.mxu0 %v963
  %v965 = vpop.f32.mrf.mxu0
  %v966 = vadd.f32 %v879, %v965
  %v967 = vpop.f32.mrf.mxu0
  %v968 = vadd.f32 %v881, %v967
  %969 = vmatprep.mubr.f32.mxu0 0.0
  %v970 = vand.u32 %v28, 4294901760
  %971 = vmatmul.mubr.f32.gmra.mxu0 %v970
  %v972 = vpop.f32.mrf.mxu0
  %v973 = vadd.f32 %v888, %v972
  %v974 = vpop.f32.mrf.mxu0
  %v975 = vadd.f32 %v890, %v974
  %976 = vdwg.mxu0
  %977 = vmatprep.subr.mxu0 0.0
  %978 = vmatpush1.msra.mxu0 0.0
  %979 = vmatprep.subr.mxu0 0.0
  %980 = vmatpush1.msra.mxu0 0.0
  %981 = vmatprep.subr.mxu0 0.0
  %982 = vmatpush1.msra.mxu0 0.0
  %983 = vmatprep.subr.mxu0 0.0
  %984 = vmatpush1.msra.mxu0 0.0
  %985 = vmatprep.subr.mxu0 0.0
  %986 = vmatpush1.msra.mxu0 0.0
  %987 = vmatprep.subr.mxu0 0.0
  %988 = vmatpush1.msra.mxu0 0.0
  %989 = vmatprep.subr.mxu0 0.0
  %990 = vmatpush1.msra.mxu0 0.0
  %991 = vmatprep.subr.mxu0 0.0
  %992 = vmatpush1.msra.mxu0 0.0
  %993 = vmatprep.subr.mxu0 0.0
  %994 = vmatpush1.msra.mxu0 0.0
  %995 = vmatprep.subr.mxu0 0.0
  %996 = vmatpush1.msra.mxu0 0.0
  %997 = vmatprep.subr.mxu0 0.0
  %998 = vmatpush1.msra.mxu0 0.0
  %999 = vmatprep.subr.mxu0 0.0
  %1000 = vmatpush1.msra.mxu0 0.0
  %1001 = vmatprep.subr.mxu0 0.0
  %1002 = vmatpush1.msra.mxu0 0.0
  %1003 = vmatprep.subr.mxu0 0.0
  %1004 = vmatpush1.msra.mxu0 0.0
  %1005 = vmatprep.subr.mxu0 0.0
  %1006 = vmatpush1.msra.mxu0 0.0
  %v1007 = vand.u32 %v16, 4294901760
  %1008 = vmatprep.subr.mxu0 %v1007
  %v1009 = vand.u32 %v15, 4294901760
  %1010 = vmatpush1.msra.mxu0 %v1009
  %1011 = vmatprep.subr.mxu0 0.0
  %1012 = vmatpush2.msra.mxu0 0.0
  %1013 = vmatprep.subr.mxu0 0.0
  %1014 = vmatpush2.msra.mxu0 0.0
  %1015 = vmatprep.subr.mxu0 0.0
  %1016 = vmatpush2.msra.mxu0 0.0
  %1017 = vmatprep.subr.mxu0 0.0
  %1018 = vmatpush2.msra.mxu0 0.0
  %1019 = vmatprep.subr.mxu0 0.0
  %1020 = vmatpush2.msra.mxu0 0.0
  %1021 = vmatprep.subr.mxu0 0.0
  %1022 = vmatpush2.msra.mxu0 0.0
  %1023 = vmatprep.subr.mxu0 0.0
  %1024 = vmatpush2.msra.mxu0 0.0
  %1025 = vmatprep.subr.mxu0 0.0
  %1026 = vmatpush2.msra.mxu0 0.0
  %1027 = vmatprep.subr.mxu0 0.0
  %1028 = vmatpush2.msra.mxu0 0.0
  %1029 = vmatprep.subr.mxu0 0.0
  %1030 = vmatpush2.msra.mxu0 0.0
  %1031 = vmatprep.subr.mxu0 0.0
  %1032 = vmatpush2.msra.mxu0 0.0
  %1033 = vmatprep.subr.mxu0 0.0
  %1034 = vmatpush2.msra.mxu0 0.0
  %1035 = vmatprep.subr.mxu0 0.0
  %1036 = vmatpush2.msra.mxu0 0.0
  %1037 = vmatprep.subr.mxu0 0.0
  %1038 = vmatpush2.msra.mxu0 0.0
  %1039 = vmatprep.subr.mxu0 0.0
  %1040 = vmatpush2.msra.mxu0 0.0
  %1041 = vmatprep.subr.mxu0 0.0
  %1042 = vmatpush2.msra.mxu0 0.0
  %1043 = vmatprep.mubr.f32.mxu0 0.0
  %v1044 = vand.u32 %v25, 4294901760
  %1045 = vmatmul.mubr.f32.gmra.mxu0 %v1044
  %v1046 = vpop.f32.mrf.mxu0
  %v1047 = vadd.f32 %v966, %v1046
  %v1048 = vpop.f32.mrf.mxu0
  %v1049 = vadd.f32 %v968, %v1048
  %1050 = vmatprep.mubr.f32.mxu0 0.0
  %v1051 = vand.u32 %v28, 4294901760
  %1052 = vmatmul.mubr.f32.gmra.mxu0 %v1051
  %v1053 = vpop.f32.mrf.mxu0
  %v1054 = vadd.f32 %v973, %v1053
  %v1055 = vpop.f32.mrf.mxu0
  %v1056 = vadd.f32 %v975, %v1055
  %1057 = vdwg.mxu0
  %1058 = vmatprep.subr.mxu0 0.0
  %1059 = vmatpush1.msra.mxu0 0.0
  %1060 = vmatprep.subr.mxu0 0.0
  %1061 = vmatpush1.msra.mxu0 0.0
  %1062 = vmatprep.subr.mxu0 0.0
  %1063 = vmatpush1.msra.mxu0 0.0
  %1064 = vmatprep.subr.mxu0 0.0
  %1065 = vmatpush1.msra.mxu0 0.0
  %1066 = vmatprep.subr.mxu0 0.0
  %1067 = vmatpush1.msra.mxu0 0.0
  %1068 = vmatprep.subr.mxu0 0.0
  %1069 = vmatpush1.msra.mxu0 0.0
  %1070 = vmatprep.subr.mxu0 0.0
  %1071 = vmatpush1.msra.mxu0 0.0
  %1072 = vmatprep.subr.mxu0 0.0
  %1073 = vmatpush1.msra.mxu0 0.0
  %1074 = vmatprep.subr.mxu0 0.0
  %1075 = vmatpush1.msra.mxu0 0.0
  %1076 = vmatprep.subr.mxu0 0.0
  %1077 = vmatpush1.msra.mxu0 0.0
  %1078 = vmatprep.subr.mxu0 0.0
  %1079 = vmatpush1.msra.mxu0 0.0
  %1080 = vmatprep.subr.mxu0 0.0
  %1081 = vmatpush1.msra.mxu0 0.0
  %1082 = vmatprep.subr.mxu0 0.0
  %1083 = vmatpush1.msra.mxu0 0.0
  %1084 = vmatprep.subr.mxu0 0.0
  %1085 = vmatpush1.msra.mxu0 0.0
  %1086 = vmatprep.subr.mxu0 0.0
  %1087 = vmatpush1.msra.mxu0 0.0
  %v1088 = vand.u32 %v18, 4294901760
  %1089 = vmatprep.subr.mxu0 %v1088
  %v1090 = vand.u32 %v17, 4294901760
  %1091 = vmatpush1.msra.mxu0 %v1090
  %1092 = vmatprep.subr.mxu0 0.0
  %1093 = vmatpush2.msra.mxu0 0.0
  %1094 = vmatprep.subr.mxu0 0.0
  %1095 = vmatpush2.msra.mxu0 0.0
  %1096 = vmatprep.subr.mxu0 0.0
  %1097 = vmatpush2.msra.mxu0 0.0
  %1098 = vmatprep.subr.mxu0 0.0
  %1099 = vmatpush2.msra.mxu0 0.0
  %1100 = vmatprep.subr.mxu0 0.0
  %1101 = vmatpush2.msra.mxu0 0.0
  %1102 = vmatprep.subr.mxu0 0.0
  %1103 = vmatpush2.msra.mxu0 0.0
  %1104 = vmatprep.subr.mxu0 0.0
  %1105 = vmatpush2.msra.mxu0 0.0
  %1106 = vmatprep.subr.mxu0 0.0
  %1107 = vmatpush2.msra.mxu0 0.0
  %1108 = vmatprep.subr.mxu0 0.0
  %1109 = vmatpush2.msra.mxu0 0.0
  %1110 = vmatprep.subr.mxu0 0.0
  %1111 = vmatpush2.msra.mxu0 0.0
  %1112 = vmatprep.subr.mxu0 0.0
  %1113 = vmatpush2.msra.mxu0 0.0
  %1114 = vmatprep.subr.mxu0 0.0
  %1115 = vmatpush2.msra.mxu0 0.0
  %1116 = vmatprep.subr.mxu0 0.0
  %1117 = vmatpush2.msra.mxu0 0.0
  %1118 = vmatprep.subr.mxu0 0.0
  %1119 = vmatpush2.msra.mxu0 0.0
  %1120 = vmatprep.subr.mxu0 0.0
  %1121 = vmatpush2.msra.mxu0 0.0
  %1122 = vmatprep.subr.mxu0 0.0
  %1123 = vmatpush2.msra.mxu0 0.0
  %1124 = vmatprep.mubr.f32.mxu0 0.0
  %v1125 = vand.u32 %v25, 4294901760
  %v1126 = vsub.f32 %v25, %v1125
  %v1127 = vand.u32 %v1126, 4294901760
  %v1128 = vsub.f32 %v1126, %v1127
  %v1129 = vand.u32 %v1128, 4294901760
  %1130 = vmatmul.mubr.f32.gmra.mxu0 %v1129
  %v1131 = vpop.f32.mrf.mxu0
  %v1132 = vadd.f32 0.0, %v1131
  %v1133 = vpop.f32.mrf.mxu0
  %v1134 = vadd.f32 0.0, %v1133
  %1135 = vmatprep.mubr.f32.mxu0 0.0
  %v1136 = vand.u32 %v28, 4294901760
  %v1137 = vsub.f32 %v28, %v1136
  %v1138 = vand.u32 %v1137, 4294901760
  %v1139 = vsub.f32 %v1137, %v1138
  %v1140 = vand.u32 %v1139, 4294901760
  %1141 = vmatmul.mubr.f32.gmra.mxu0 %v1140
  %v1142 = vpop.f32.mrf.mxu0
  %v1143 = vadd.f32 0.0, %v1142
  %v1144 = vpop.f32.mrf.mxu0
  %v1145 = vadd.f32 0.0, %v1144
  %1146 = vdwg.mxu0
  %1147 = vmatprep.subr.mxu0 0.0
  %1148 = vmatpush1.msra.mxu0 0.0
  %1149 = vmatprep.subr.mxu0 0.0
  %1150 = vmatpush1.msra.mxu0 0.0
  %1151 = vmatprep.subr.mxu0 0.0
  %1152 = vmatpush1.msra.mxu0 0.0
  %1153 = vmatprep.subr.mxu0 0.0
  %1154 = vmatpush1.msra.mxu0 0.0
  %1155 = vmatprep.subr.mxu0 0.0
  %1156 = vmatpush1.msra.mxu0 0.0
  %1157 = vmatprep.subr.mxu0 0.0
  %1158 = vmatpush1.msra.mxu0 0.0
  %1159 = vmatprep.subr.mxu0 0.0
  %1160 = vmatpush1.msra.mxu0 0.0
  %1161 = vmatprep.subr.mxu0 0.0
  %1162 = vmatpush1.msra.mxu0 0.0
  %1163 = vmatprep.subr.mxu0 0.0
  %1164 = vmatpush1.msra.mxu0 0.0
  %1165 = vmatprep.subr.mxu0 0.0
  %1166 = vmatpush1.msra.mxu0 0.0
  %1167 = vmatprep.subr.mxu0 0.0
  %1168 = vmatpush1.msra.mxu0 0.0
  %1169 = vmatprep.subr.mxu0 0.0
  %1170 = vmatpush1.msra.mxu0 0.0
  %1171 = vmatprep.subr.mxu0 0.0
  %1172 = vmatpush1.msra.mxu0 0.0
  %1173 = vmatprep.subr.mxu0 0.0
  %1174 = vmatpush1.msra.mxu0 0.0
  %1175 = vmatprep.subr.mxu0 0.0
  %1176 = vmatpush1.msra.mxu0 0.0
  %v1177 = vand.u32 %v18, 4294901760
  %v1178 = vsub.f32 %v18, %v1177
  %v1179 = vand.u32 %v1178, 4294901760
  %v1180 = vsub.f32 %v1178, %v1179
  %v1181 = vand.u32 %v1180, 4294901760
  %1182 = vmatprep.subr.mxu0 %v1181
  %v1183 = vand.u32 %v17, 4294901760
  %v1184 = vsub.f32 %v17, %v1183
  %v1185 = vand.u32 %v1184, 4294901760
  %v1186 = vsub.f32 %v1184, %v1185
  %v1187 = vand.u32 %v1186, 4294901760
  %1188 = vmatpush1.msra.mxu0 %v1187
  %1189 = vmatprep.subr.mxu0 0.0
  %1190 = vmatpush2.msra.mxu0 0.0
  %1191 = vmatprep.subr.mxu0 0.0
  %1192 = vmatpush2.msra.mxu0 0.0
  %1193 = vmatprep.subr.mxu0 0.0
  %1194 = vmatpush2.msra.mxu0 0.0
  %1195 = vmatprep.subr.mxu0 0.0
  %1196 = vmatpush2.msra.mxu0 0.0
  %1197 = vmatprep.subr.mxu0 0.0
  %1198 = vmatpush2.msra.mxu0 0.0
  %1199 = vmatprep.subr.mxu0 0.0
  %1200 = vmatpush2.msra.mxu0 0.0
  %1201 = vmatprep.subr.mxu0 0.0
  %1202 = vmatpush2.msra.mxu0 0.0
  %1203 = vmatprep.subr.mxu0 0.0
  %1204 = vmatpush2.msra.mxu0 0.0
  %1205 = vmatprep.subr.mxu0 0.0
  %1206 = vmatpush2.msra.mxu0 0.0
  %1207 = vmatprep.subr.mxu0 0.0
  %1208 = vmatpush2.msra.mxu0 0.0
  %1209 = vmatprep.subr.mxu0 0.0
  %1210 = vmatpush2.msra.mxu0 0.0
  %1211 = vmatprep.subr.mxu0 0.0
  %1212 = vmatpush2.msra.mxu0 0.0
  %1213 = vmatprep.subr.mxu0 0.0
  %1214 = vmatpush2.msra.mxu0 0.0
  %1215 = vmatprep.subr.mxu0 0.0
  %1216 = vmatpush2.msra.mxu0 0.0
  %1217 = vmatprep.subr.mxu0 0.0
  %1218 = vmatpush2.msra.mxu0 0.0
  %1219 = vmatprep.subr.mxu0 0.0
  %1220 = vmatpush2.msra.mxu0 0.0
  %1221 = vmatprep.mubr.f32.mxu0 0.0
  %v1222 = vand.u32 %v25, 4294901760
  %1223 = vmatmul.mubr.f32.gmra.mxu0 %v1222
  %v1224 = vpop.f32.mrf.mxu0
  %v1225 = vadd.f32 %v1132, %v1224
  %v1226 = vpop.f32.mrf.mxu0
  %v1227 = vadd.f32 %v1134, %v1226
  %1228 = vmatprep.mubr.f32.mxu0 0.0
  %v1229 = vand.u32 %v28, 4294901760
  %1230 = vmatmul.mubr.f32.gmra.mxu0 %v1229
  %v1231 = vpop.f32.mrf.mxu0
  %v1232 = vadd.f32 %v1143, %v1231
  %v1233 = vpop.f32.mrf.mxu0
  %v1234 = vadd.f32 %v1145, %v1233
  %1235 = vdwg.mxu0
  %1236 = vmatprep.subr.mxu0 0.0
  %1237 = vmatpush1.msra.mxu0 0.0
  %1238 = vmatprep.subr.mxu0 0.0
  %1239 = vmatpush1.msra.mxu0 0.0
  %1240 = vmatprep.subr.mxu0 0.0
  %1241 = vmatpush1.msra.mxu0 0.0
  %1242 = vmatprep.subr.mxu0 0.0
  %1243 = vmatpush1.msra.mxu0 0.0
  %1244 = vmatprep.subr.mxu0 0.0
  %1245 = vmatpush1.msra.mxu0 0.0
  %1246 = vmatprep.subr.mxu0 0.0
  %1247 = vmatpush1.msra.mxu0 0.0
  %1248 = vmatprep.subr.mxu0 0.0
  %1249 = vmatpush1.msra.mxu0 0.0
  %1250 = vmatprep.subr.mxu0 0.0
  %1251 = vmatpush1.msra.mxu0 0.0
  %1252 = vmatprep.subr.mxu0 0.0
  %1253 = vmatpush1.msra.mxu0 0.0
  %1254 = vmatprep.subr.mxu0 0.0
  %1255 = vmatpush1.msra.mxu0 0.0
  %1256 = vmatprep.subr.mxu0 0.0
  %1257 = vmatpush1.msra.mxu0 0.0
  %1258 = vmatprep.subr.mxu0 0.0
  %1259 = vmatpush1.msra.mxu0 0.0
  %1260 = vmatprep.subr.mxu0 0.0
  %1261 = vmatpush1.msra.mxu0 0.0
  %1262 = vmatprep.subr.mxu0 0.0
  %1263 = vmatpush1.msra.mxu0 0.0
  %1264 = vmatprep.subr.mxu0 0.0
  %1265 = vmatpush1.msra.mxu0 0.0
  %v1266 = vand.u32 %v18, 4294901760
  %v1267 = vsub.f32 %v18, %v1266
  %1268 = vmatprep.subr.mxu0 %v1267
  %v1269 = vand.u32 %v17, 4294901760
  %v1270 = vsub.f32 %v17, %v1269
  %1271 = vmatpush1.msra.mxu0 %v1270
  %1272 = vmatprep.subr.mxu0 0.0
  %1273 = vmatpush2.msra.mxu0 0.0
  %1274 = vmatprep.subr.mxu0 0.0
  %1275 = vmatpush2.msra.mxu0 0.0
  %1276 = vmatprep.subr.mxu0 0.0
  %1277 = vmatpush2.msra.mxu0 0.0
  %1278 = vmatprep.subr.mxu0 0.0
  %1279 = vmatpush2.msra.mxu0 0.0
  %1280 = vmatprep.subr.mxu0 0.0
  %1281 = vmatpush2.msra.mxu0 0.0
  %1282 = vmatprep.subr.mxu0 0.0
  %1283 = vmatpush2.msra.mxu0 0.0
  %1284 = vmatprep.subr.mxu0 0.0
  %1285 = vmatpush2.msra.mxu0 0.0
  %1286 = vmatprep.subr.mxu0 0.0
  %1287 = vmatpush2.msra.mxu0 0.0
  %1288 = vmatprep.subr.mxu0 0.0
  %1289 = vmatpush2.msra.mxu0 0.0
  %1290 = vmatprep.subr.mxu0 0.0
  %1291 = vmatpush2.msra.mxu0 0.0
  %1292 = vmatprep.subr.mxu0 0.0
  %1293 = vmatpush2.msra.mxu0 0.0
  %1294 = vmatprep.subr.mxu0 0.0
  %1295 = vmatpush2.msra.mxu0 0.0
  %1296 = vmatprep.subr.mxu0 0.0
  %1297 = vmatpush2.msra.mxu0 0.0
  %1298 = vmatprep.subr.mxu0 0.0
  %1299 = vmatpush2.msra.mxu0 0.0
  %1300 = vmatprep.subr.mxu0 0.0
  %1301 = vmatpush2.msra.mxu0 0.0
  %1302 = vmatprep.subr.mxu0 0.0
  %1303 = vmatpush2.msra.mxu0 0.0
  %1304 = vmatprep.mubr.f32.mxu0 0.0
  %v1305 = vand.u32 %v25, 4294901760
  %v1306 = vsub.f32 %v25, %v1305
  %1307 = vmatmul.mubr.f32.gmra.mxu0 %v1306
  %v1308 = vpop.f32.mrf.mxu0
  %v1309 = vadd.f32 %v1225, %v1308
  %v1310 = vpop.f32.mrf.mxu0
  %v1311 = vadd.f32 %v1227, %v1310
  %1312 = vmatprep.mubr.f32.mxu0 0.0
  %v1313 = vand.u32 %v28, 4294901760
  %v1314 = vsub.f32 %v28, %v1313
  %1315 = vmatmul.mubr.f32.gmra.mxu0 %v1314
  %v1316 = vpop.f32.mrf.mxu0
  %v1317 = vadd.f32 %v1232, %v1316
  %v1318 = vpop.f32.mrf.mxu0
  %v1319 = vadd.f32 %v1234, %v1318
  %1320 = vdwg.mxu0
  %1321 = vmatprep.subr.mxu0 0.0
  %1322 = vmatpush1.msra.mxu0 0.0
  %1323 = vmatprep.subr.mxu0 0.0
  %1324 = vmatpush1.msra.mxu0 0.0
  %1325 = vmatprep.subr.mxu0 0.0
  %1326 = vmatpush1.msra.mxu0 0.0
  %1327 = vmatprep.subr.mxu0 0.0
  %1328 = vmatpush1.msra.mxu0 0.0
  %1329 = vmatprep.subr.mxu0 0.0
  %1330 = vmatpush1.msra.mxu0 0.0
  %1331 = vmatprep.subr.mxu0 0.0
  %1332 = vmatpush1.msra.mxu0 0.0
  %1333 = vmatprep.subr.mxu0 0.0
  %1334 = vmatpush1.msra.mxu0 0.0
  %1335 = vmatprep.subr.mxu0 0.0
  %1336 = vmatpush1.msra.mxu0 0.0
  %1337 = vmatprep.subr.mxu0 0.0
  %1338 = vmatpush1.msra.mxu0 0.0
  %1339 = vmatprep.subr.mxu0 0.0
  %1340 = vmatpush1.msra.mxu0 0.0
  %1341 = vmatprep.subr.mxu0 0.0
  %1342 = vmatpush1.msra.mxu0 0.0
  %1343 = vmatprep.subr.mxu0 0.0
  %1344 = vmatpush1.msra.mxu0 0.0
  %1345 = vmatprep.subr.mxu0 0.0
  %1346 = vmatpush1.msra.mxu0 0.0
  %1347 = vmatprep.subr.mxu0 0.0
  %1348 = vmatpush1.msra.mxu0 0.0
  %1349 = vmatprep.subr.mxu0 0.0
  %1350 = vmatpush1.msra.mxu0 0.0
  %v1351 = vand.u32 %v18, 4294901760
  %1352 = vmatprep.subr.mxu0 %v1351
  %v1353 = vand.u32 %v17, 4294901760
  %1354 = vmatpush1.msra.mxu0 %v1353
  %1355 = vmatprep.subr.mxu0 0.0
  %1356 = vmatpush2.msra.mxu0 0.0
  %1357 = vmatprep.subr.mxu0 0.0
  %1358 = vmatpush2.msra.mxu0 0.0
  %1359 = vmatprep.subr.mxu0 0.0
  %1360 = vmatpush2.msra.mxu0 0.0
  %1361 = vmatprep.subr.mxu0 0.0
  %1362 = vmatpush2.msra.mxu0 0.0
  %1363 = vmatprep.subr.mxu0 0.0
  %1364 = vmatpush2.msra.mxu0 0.0
  %1365 = vmatprep.subr.mxu0 0.0
  %1366 = vmatpush2.msra.mxu0 0.0
  %1367 = vmatprep.subr.mxu0 0.0
  %1368 = vmatpush2.msra.mxu0 0.0
  %1369 = vmatprep.subr.mxu0 0.0
  %1370 = vmatpush2.msra.mxu0 0.0
  %1371 = vmatprep.subr.mxu0 0.0
  %1372 = vmatpush2.msra.mxu0 0.0
  %1373 = vmatprep.subr.mxu0 0.0
  %1374 = vmatpush2.msra.mxu0 0.0
  %1375 = vmatprep.subr.mxu0 0.0
  %1376 = vmatpush2.msra.mxu0 0.0
  %1377 = vmatprep.subr.mxu0 0.0
  %1378 = vmatpush2.msra.mxu0 0.0
  %1379 = vmatprep.subr.mxu0 0.0
  %1380 = vmatpush2.msra.mxu0 0.0
  %1381 = vmatprep.subr.mxu0 0.0
  %1382 = vmatpush2.msra.mxu0 0.0
  %1383 = vmatprep.subr.mxu0 0.0
  %1384 = vmatpush2.msra.mxu0 0.0
  %1385 = vmatprep.subr.mxu0 0.0
  %1386 = vmatpush2.msra.mxu0 0.0
  %1387 = vmatprep.mubr.f32.mxu0 0.0
  %v1388 = vand.u32 %v25, 4294901760
  %v1389 = vsub.f32 %v25, %v1388
  %v1390 = vand.u32 %v1389, 4294901760
  %1391 = vmatmul.mubr.f32.gmra.mxu0 %v1390
  %v1392 = vpop.f32.mrf.mxu0
  %v1393 = vadd.f32 %v1309, %v1392
  %v1394 = vpop.f32.mrf.mxu0
  %v1395 = vadd.f32 %v1311, %v1394
  %1396 = vmatprep.mubr.f32.mxu0 0.0
  %v1397 = vand.u32 %v28, 4294901760
  %v1398 = vsub.f32 %v28, %v1397
  %v1399 = vand.u32 %v1398, 4294901760
  %1400 = vmatmul.mubr.f32.gmra.mxu0 %v1399
  %v1401 = vpop.f32.mrf.mxu0
  %v1402 = vadd.f32 %v1317, %v1401
  %v1403 = vpop.f32.mrf.mxu0
  %v1404 = vadd.f32 %v1319, %v1403
  %1405 = vdwg.mxu0
  %1406 = vmatprep.subr.mxu0 0.0
  %1407 = vmatpush1.msra.mxu0 0.0
  %1408 = vmatprep.subr.mxu0 0.0
  %1409 = vmatpush1.msra.mxu0 0.0
  %1410 = vmatprep.subr.mxu0 0.0
  %1411 = vmatpush1.msra.mxu0 0.0
  %1412 = vmatprep.subr.mxu0 0.0
  %1413 = vmatpush1.msra.mxu0 0.0
  %1414 = vmatprep.subr.mxu0 0.0
  %1415 = vmatpush1.msra.mxu0 0.0
  %1416 = vmatprep.subr.mxu0 0.0
  %1417 = vmatpush1.msra.mxu0 0.0
  %1418 = vmatprep.subr.mxu0 0.0
  %1419 = vmatpush1.msra.mxu0 0.0
  %1420 = vmatprep.subr.mxu0 0.0
  %1421 = vmatpush1.msra.mxu0 0.0
  %1422 = vmatprep.subr.mxu0 0.0
  %1423 = vmatpush1.msra.mxu0 0.0
  %1424 = vmatprep.subr.mxu0 0.0
  %1425 = vmatpush1.msra.mxu0 0.0
  %1426 = vmatprep.subr.mxu0 0.0
  %1427 = vmatpush1.msra.mxu0 0.0
  %1428 = vmatprep.subr.mxu0 0.0
  %1429 = vmatpush1.msra.mxu0 0.0
  %1430 = vmatprep.subr.mxu0 0.0
  %1431 = vmatpush1.msra.mxu0 0.0
  %1432 = vmatprep.subr.mxu0 0.0
  %1433 = vmatpush1.msra.mxu0 0.0
  %1434 = vmatprep.subr.mxu0 0.0
  %1435 = vmatpush1.msra.mxu0 0.0
  %v1436 = vand.u32 %v18, 4294901760
  %v1437 = vsub.f32 %v18, %v1436
  %v1438 = vand.u32 %v1437, 4294901760
  %1439 = vmatprep.subr.mxu0 %v1438
  %v1440 = vand.u32 %v17, 4294901760
  %v1441 = vsub.f32 %v17, %v1440
  %v1442 = vand.u32 %v1441, 4294901760
  %1443 = vmatpush1.msra.mxu0 %v1442
  %1444 = vmatprep.subr.mxu0 0.0
  %1445 = vmatpush2.msra.mxu0 0.0
  %1446 = vmatprep.subr.mxu0 0.0
  %1447 = vmatpush2.msra.mxu0 0.0
  %1448 = vmatprep.subr.mxu0 0.0
  %1449 = vmatpush2.msra.mxu0 0.0
  %1450 = vmatprep.subr.mxu0 0.0
  %1451 = vmatpush2.msra.mxu0 0.0
  %1452 = vmatprep.subr.mxu0 0.0
  %1453 = vmatpush2.msra.mxu0 0.0
  %1454 = vmatprep.subr.mxu0 0.0
  %1455 = vmatpush2.msra.mxu0 0.0
  %1456 = vmatprep.subr.mxu0 0.0
  %1457 = vmatpush2.msra.mxu0 0.0
  %1458 = vmatprep.subr.mxu0 0.0
  %1459 = vmatpush2.msra.mxu0 0.0
  %1460 = vmatprep.subr.mxu0 0.0
  %1461 = vmatpush2.msra.mxu0 0.0
  %1462 = vmatprep.subr.mxu0 0.0
  %1463 = vmatpush2.msra.mxu0 0.0
  %1464 = vmatprep.subr.mxu0 0.0
  %1465 = vmatpush2.msra.mxu0 0.0
  %1466 = vmatprep.subr.mxu0 0.0
  %1467 = vmatpush2.msra.mxu0 0.0
  %1468 = vmatprep.subr.mxu0 0.0
  %1469 = vmatpush2.msra.mxu0 0.0
  %1470 = vmatprep.subr.mxu0 0.0
  %1471 = vmatpush2.msra.mxu0 0.0
  %1472 = vmatprep.subr.mxu0 0.0
  %1473 = vmatpush2.msra.mxu0 0.0
  %1474 = vmatprep.subr.mxu0 0.0
  %1475 = vmatpush2.msra.mxu0 0.0
  %1476 = vmatprep.mubr.f32.mxu0 0.0
  %v1477 = vand.u32 %v25, 4294901760
  %1478 = vmatmul.mubr.f32.gmra.mxu0 %v1477
  %v1479 = vpop.f32.mrf.mxu0
  %v1480 = vadd.f32 %v1393, %v1479
  %v1481 = vpop.f32.mrf.mxu0
  %v1482 = vadd.f32 %v1395, %v1481
  %1483 = vmatprep.mubr.f32.mxu0 0.0
  %v1484 = vand.u32 %v28, 4294901760
  %1485 = vmatmul.mubr.f32.gmra.mxu0 %v1484
  %v1486 = vpop.f32.mrf.mxu0
  %v1487 = vadd.f32 %v1402, %v1486
  %v1488 = vpop.f32.mrf.mxu0
  %v1489 = vadd.f32 %v1404, %v1488
  %1490 = vdwg.mxu0
  %1491 = vmatprep.subr.mxu0 0.0
  %1492 = vmatpush1.msra.mxu0 0.0
  %1493 = vmatprep.subr.mxu0 0.0
  %1494 = vmatpush1.msra.mxu0 0.0
  %1495 = vmatprep.subr.mxu0 0.0
  %1496 = vmatpush1.msra.mxu0 0.0
  %1497 = vmatprep.subr.mxu0 0.0
  %1498 = vmatpush1.msra.mxu0 0.0
  %1499 = vmatprep.subr.mxu0 0.0
  %1500 = vmatpush1.msra.mxu0 0.0
  %1501 = vmatprep.subr.mxu0 0.0
  %1502 = vmatpush1.msra.mxu0 0.0
  %1503 = vmatprep.subr.mxu0 0.0
  %1504 = vmatpush1.msra.mxu0 0.0
  %1505 = vmatprep.subr.mxu0 0.0
  %1506 = vmatpush1.msra.mxu0 0.0
  %1507 = vmatprep.subr.mxu0 0.0
  %1508 = vmatpush1.msra.mxu0 0.0
  %1509 = vmatprep.subr.mxu0 0.0
  %1510 = vmatpush1.msra.mxu0 0.0
  %1511 = vmatprep.subr.mxu0 0.0
  %1512 = vmatpush1.msra.mxu0 0.0
  %1513 = vmatprep.subr.mxu0 0.0
  %1514 = vmatpush1.msra.mxu0 0.0
  %1515 = vmatprep.subr.mxu0 0.0
  %1516 = vmatpush1.msra.mxu0 0.0
  %1517 = vmatprep.subr.mxu0 0.0
  %1518 = vmatpush1.msra.mxu0 0.0
  %1519 = vmatprep.subr.mxu0 0.0
  %1520 = vmatpush1.msra.mxu0 0.0
  %v1521 = vand.u32 %v18, 4294901760
  %1522 = vmatprep.subr.mxu0 %v1521
  %v1523 = vand.u32 %v17, 4294901760
  %1524 = vmatpush1.msra.mxu0 %v1523
  %1525 = vmatprep.subr.mxu0 0.0
  %1526 = vmatpush2.msra.mxu0 0.0
  %1527 = vmatprep.subr.mxu0 0.0
  %1528 = vmatpush2.msra.mxu0 0.0
  %1529 = vmatprep.subr.mxu0 0.0
  %1530 = vmatpush2.msra.mxu0 0.0
  %1531 = vmatprep.subr.mxu0 0.0
  %1532 = vmatpush2.msra.mxu0 0.0
  %1533 = vmatprep.subr.mxu0 0.0
  %1534 = vmatpush2.msra.mxu0 0.0
  %1535 = vmatprep.subr.mxu0 0.0
  %1536 = vmatpush2.msra.mxu0 0.0
  %1537 = vmatprep.subr.mxu0 0.0
  %1538 = vmatpush2.msra.mxu0 0.0
  %1539 = vmatprep.subr.mxu0 0.0
  %1540 = vmatpush2.msra.mxu0 0.0
  %1541 = vmatprep.subr.mxu0 0.0
  %1542 = vmatpush2.msra.mxu0 0.0
  %1543 = vmatprep.subr.mxu0 0.0
  %1544 = vmatpush2.msra.mxu0 0.0
  %1545 = vmatprep.subr.mxu0 0.0
  %1546 = vmatpush2.msra.mxu0 0.0
  %1547 = vmatprep.subr.mxu0 0.0
  %1548 = vmatpush2.msra.mxu0 0.0
  %1549 = vmatprep.subr.mxu0 0.0
  %1550 = vmatpush2.msra.mxu0 0.0
  %1551 = vmatprep.subr.mxu0 0.0
  %1552 = vmatpush2.msra.mxu0 0.0
  %1553 = vmatprep.subr.mxu0 0.0
  %1554 = vmatpush2.msra.mxu0 0.0
  %1555 = vmatprep.subr.mxu0 0.0
  %1556 = vmatpush2.msra.mxu0 0.0
  %1557 = vmatprep.mubr.f32.mxu0 0.0
  %v1558 = vand.u32 %v25, 4294901760
  %1559 = vmatmul.mubr.f32.gmra.mxu0 %v1558
  %v1560 = vpop.f32.mrf.mxu0
  %v1561 = vadd.f32 %v1480, %v1560
  %v1562 = vpop.f32.mrf.mxu0
  %v1563 = vadd.f32 %v1482, %v1562
  %1564 = vmatprep.mubr.f32.mxu0 0.0
  %v1565 = vand.u32 %v28, 4294901760
  %1566 = vmatmul.mubr.f32.gmra.mxu0 %v1565
  %v1567 = vpop.f32.mrf.mxu0
  %v1568 = vadd.f32 %v1487, %v1567
  %v1569 = vpop.f32.mrf.mxu0
  %v1570 = vadd.f32 %v1489, %v1569
  %1571 = vdwg.mxu0
  %1572 = vmatprep.subr.mxu0 0.0
  %1573 = vmatpush1.msra.mxu0 0.0
  %1574 = vmatprep.subr.mxu0 0.0
  %1575 = vmatpush1.msra.mxu0 0.0
  %1576 = vmatprep.subr.mxu0 0.0
  %1577 = vmatpush1.msra.mxu0 0.0
  %1578 = vmatprep.subr.mxu0 0.0
  %1579 = vmatpush1.msra.mxu0 0.0
  %1580 = vmatprep.subr.mxu0 0.0
  %1581 = vmatpush1.msra.mxu0 0.0
  %1582 = vmatprep.subr.mxu0 0.0
  %1583 = vmatpush1.msra.mxu0 0.0
  %1584 = vmatprep.subr.mxu0 0.0
  %1585 = vmatpush1.msra.mxu0 0.0
  %1586 = vmatprep.subr.mxu0 0.0
  %1587 = vmatpush1.msra.mxu0 0.0
  %1588 = vmatprep.subr.mxu0 0.0
  %1589 = vmatpush1.msra.mxu0 0.0
  %1590 = vmatprep.subr.mxu0 0.0
  %1591 = vmatpush1.msra.mxu0 0.0
  %1592 = vmatprep.subr.mxu0 0.0
  %1593 = vmatpush1.msra.mxu0 0.0
  %1594 = vmatprep.subr.mxu0 0.0
  %1595 = vmatpush1.msra.mxu0 0.0
  %1596 = vmatprep.subr.mxu0 0.0
  %1597 = vmatpush1.msra.mxu0 0.0
  %1598 = vmatprep.subr.mxu0 0.0
  %1599 = vmatpush1.msra.mxu0 0.0
  %1600 = vmatprep.subr.mxu0 0.0
  %1601 = vmatpush1.msra.mxu0 0.0
  %v1602 = vand.u32 %v20, 4294901760
  %1603 = vmatprep.subr.mxu0 %v1602
  %v1604 = vand.u32 %v19, 4294901760
  %1605 = vmatpush1.msra.mxu0 %v1604
  %1606 = vmatprep.subr.mxu0 0.0
  %1607 = vmatpush2.msra.mxu0 0.0
  %1608 = vmatprep.subr.mxu0 0.0
  %1609 = vmatpush2.msra.mxu0 0.0
  %1610 = vmatprep.subr.mxu0 0.0
  %1611 = vmatpush2.msra.mxu0 0.0
  %1612 = vmatprep.subr.mxu0 0.0
  %1613 = vmatpush2.msra.mxu0 0.0
  %1614 = vmatprep.subr.mxu0 0.0
  %1615 = vmatpush2.msra.mxu0 0.0
  %1616 = vmatprep.subr.mxu0 0.0
  %1617 = vmatpush2.msra.mxu0 0.0
  %1618 = vmatprep.subr.mxu0 0.0
  %1619 = vmatpush2.msra.mxu0 0.0
  %1620 = vmatprep.subr.mxu0 0.0
  %1621 = vmatpush2.msra.mxu0 0.0
  %1622 = vmatprep.subr.mxu0 0.0
  %1623 = vmatpush2.msra.mxu0 0.0
  %1624 = vmatprep.subr.mxu0 0.0
  %1625 = vmatpush2.msra.mxu0 0.0
  %1626 = vmatprep.subr.mxu0 0.0
  %1627 = vmatpush2.msra.mxu0 0.0
  %1628 = vmatprep.subr.mxu0 0.0
  %1629 = vmatpush2.msra.mxu0 0.0
  %1630 = vmatprep.subr.mxu0 0.0
  %1631 = vmatpush2.msra.mxu0 0.0
  %1632 = vmatprep.subr.mxu0 0.0
  %1633 = vmatpush2.msra.mxu0 0.0
  %1634 = vmatprep.subr.mxu0 0.0
  %1635 = vmatpush2.msra.mxu0 0.0
  %1636 = vmatprep.subr.mxu0 0.0
  %1637 = vmatpush2.msra.mxu0 0.0
  %1638 = vmatprep.mubr.f32.mxu0 0.0
  %v1639 = vand.u32 %v25, 4294901760
  %v1640 = vsub.f32 %v25, %v1639
  %v1641 = vand.u32 %v1640, 4294901760
  %v1642 = vsub.f32 %v1640, %v1641
  %v1643 = vand.u32 %v1642, 4294901760
  %1644 = vmatmul.mubr.f32.gmra.mxu0 %v1643
  %v1645 = vpop.f32.mrf.mxu0
  %v1646 = vadd.f32 0.0, %v1645
  %v1647 = vpop.f32.mrf.mxu0
  %v1648 = vadd.f32 0.0, %v1647
  %1649 = vmatprep.mubr.f32.mxu0 0.0
  %v1650 = vand.u32 %v28, 4294901760
  %v1651 = vsub.f32 %v28, %v1650
  %v1652 = vand.u32 %v1651, 4294901760
  %v1653 = vsub.f32 %v1651, %v1652
  %v1654 = vand.u32 %v1653, 4294901760
  %1655 = vmatmul.mubr.f32.gmra.mxu0 %v1654
  %v1656 = vpop.f32.mrf.mxu0
  %v1657 = vadd.f32 0.0, %v1656
  %v1658 = vpop.f32.mrf.mxu0
  %v1659 = vadd.f32 0.0, %v1658
  %1660 = vdwg.mxu0
  %1661 = vmatprep.subr.mxu0 0.0
  %1662 = vmatpush1.msra.mxu0 0.0
  %1663 = vmatprep.subr.mxu0 0.0
  %1664 = vmatpush1.msra.mxu0 0.0
  %1665 = vmatprep.subr.mxu0 0.0
  %1666 = vmatpush1.msra.mxu0 0.0
  %1667 = vmatprep.subr.mxu0 0.0
  %1668 = vmatpush1.msra.mxu0 0.0
  %1669 = vmatprep.subr.mxu0 0.0
  %1670 = vmatpush1.msra.mxu0 0.0
  %1671 = vmatprep.subr.mxu0 0.0
  %1672 = vmatpush1.msra.mxu0 0.0
  %1673 = vmatprep.subr.mxu0 0.0
  %1674 = vmatpush1.msra.mxu0 0.0
  %1675 = vmatprep.subr.mxu0 0.0
  %1676 = vmatpush1.msra.mxu0 0.0
  %1677 = vmatprep.subr.mxu0 0.0
  %1678 = vmatpush1.msra.mxu0 0.0
  %1679 = vmatprep.subr.mxu0 0.0
  %1680 = vmatpush1.msra.mxu0 0.0
  %1681 = vmatprep.subr.mxu0 0.0
  %1682 = vmatpush1.msra.mxu0 0.0
  %1683 = vmatprep.subr.mxu0 0.0
  %1684 = vmatpush1.msra.mxu0 0.0
  %1685 = vmatprep.subr.mxu0 0.0
  %1686 = vmatpush1.msra.mxu0 0.0
  %1687 = vmatprep.subr.mxu0 0.0
  %1688 = vmatpush1.msra.mxu0 0.0
  %1689 = vmatprep.subr.mxu0 0.0
  %1690 = vmatpush1.msra.mxu0 0.0
  %v1691 = vand.u32 %v20, 4294901760
  %v1692 = vsub.f32 %v20, %v1691
  %v1693 = vand.u32 %v1692, 4294901760
  %v1694 = vsub.f32 %v1692, %v1693
  %v1695 = vand.u32 %v1694, 4294901760
  %1696 = vmatprep.subr.mxu0 %v1695
  %v1697 = vand.u32 %v19, 4294901760
  %v1698 = vsub.f32 %v19, %v1697
  %v1699 = vand.u32 %v1698, 4294901760
  %v1700 = vsub.f32 %v1698, %v1699
  %v1701 = vand.u32 %v1700, 4294901760
  %1702 = vmatpush1.msra.mxu0 %v1701
  %1703 = vmatprep.subr.mxu0 0.0
  %1704 = vmatpush2.msra.mxu0 0.0
  %1705 = vmatprep.subr.mxu0 0.0
  %1706 = vmatpush2.msra.mxu0 0.0
  %1707 = vmatprep.subr.mxu0 0.0
  %1708 = vmatpush2.msra.mxu0 0.0
  %1709 = vmatprep.subr.mxu0 0.0
  %1710 = vmatpush2.msra.mxu0 0.0
  %1711 = vmatprep.subr.mxu0 0.0
  %1712 = vmatpush2.msra.mxu0 0.0
  %1713 = vmatprep.subr.mxu0 0.0
  %1714 = vmatpush2.msra.mxu0 0.0
  %1715 = vmatprep.subr.mxu0 0.0
  %1716 = vmatpush2.msra.mxu0 0.0
  %1717 = vmatprep.subr.mxu0 0.0
  %1718 = vmatpush2.msra.mxu0 0.0
  %1719 = vmatprep.subr.mxu0 0.0
  %1720 = vmatpush2.msra.mxu0 0.0
  %1721 = vmatprep.subr.mxu0 0.0
  %1722 = vmatpush2.msra.mxu0 0.0
  %1723 = vmatprep.subr.mxu0 0.0
  %1724 = vmatpush2.msra.mxu0 0.0
  %1725 = vmatprep.subr.mxu0 0.0
  %1726 = vmatpush2.msra.mxu0 0.0
  %1727 = vmatprep.subr.mxu0 0.0
  %1728 = vmatpush2.msra.mxu0 0.0
  %1729 = vmatprep.subr.mxu0 0.0
  %1730 = vmatpush2.msra.mxu0 0.0
  %1731 = vmatprep.subr.mxu0 0.0
  %1732 = vmatpush2.msra.mxu0 0.0
  %1733 = vmatprep.subr.mxu0 0.0
  %1734 = vmatpush2.msra.mxu0 0.0
  %1735 = vmatprep.mubr.f32.mxu0 0.0
  %v1736 = vand.u32 %v25, 4294901760
  %1737 = vmatmul.mubr.f32.gmra.mxu0 %v1736
  %v1738 = vpop.f32.mrf.mxu0
  %v1739 = vadd.f32 %v1646, %v1738
  %v1740 = vpop.f32.mrf.mxu0
  %v1741 = vadd.f32 %v1648, %v1740
  %1742 = vmatprep.mubr.f32.mxu0 0.0
  %v1743 = vand.u32 %v28, 4294901760
  %1744 = vmatmul.mubr.f32.gmra.mxu0 %v1743
  %v1745 = vpop.f32.mrf.mxu0
  %v1746 = vadd.f32 %v1657, %v1745
  %v1747 = vpop.f32.mrf.mxu0
  %v1748 = vadd.f32 %v1659, %v1747
  %1749 = vdwg.mxu0
  %1750 = vmatprep.subr.mxu0 0.0
  %1751 = vmatpush1.msra.mxu0 0.0
  %1752 = vmatprep.subr.mxu0 0.0
  %1753 = vmatpush1.msra.mxu0 0.0
  %1754 = vmatprep.subr.mxu0 0.0
  %1755 = vmatpush1.msra.mxu0 0.0
  %1756 = vmatprep.subr.mxu0 0.0
  %1757 = vmatpush1.msra.mxu0 0.0
  %1758 = vmatprep.subr.mxu0 0.0
  %1759 = vmatpush1.msra.mxu0 0.0
  %1760 = vmatprep.subr.mxu0 0.0
  %1761 = vmatpush1.msra.mxu0 0.0
  %1762 = vmatprep.subr.mxu0 0.0
  %1763 = vmatpush1.msra.mxu0 0.0
  %1764 = vmatprep.subr.mxu0 0.0
  %1765 = vmatpush1.msra.mxu0 0.0
  %1766 = vmatprep.subr.mxu0 0.0
  %1767 = vmatpush1.msra.mxu0 0.0
  %1768 = vmatprep.subr.mxu0 0.0
  %1769 = vmatpush1.msra.mxu0 0.0
  %1770 = vmatprep.subr.mxu0 0.0
  %1771 = vmatpush1.msra.mxu0 0.0
  %1772 = vmatprep.subr.mxu0 0.0
  %1773 = vmatpush1.msra.mxu0 0.0
  %1774 = vmatprep.subr.mxu0 0.0
  %1775 = vmatpush1.msra.mxu0 0.0
  %1776 = vmatprep.subr.mxu0 0.0
  %1777 = vmatpush1.msra.mxu0 0.0
  %1778 = vmatprep.subr.mxu0 0.0
  %1779 = vmatpush1.msra.mxu0 0.0
  %v1780 = vand.u32 %v20, 4294901760
  %v1781 = vsub.f32 %v20, %v1780
  %1782 = vmatprep.subr.mxu0 %v1781
  %v1783 = vand.u32 %v19, 4294901760
  %v1784 = vsub.f32 %v19, %v1783
  %1785 = vmatpush1.msra.mxu0 %v1784
  %1786 = vmatprep.subr.mxu0 0.0
  %1787 = vmatpush2.msra.mxu0 0.0
  %1788 = vmatprep.subr.mxu0 0.0
  %1789 = vmatpush2.msra.mxu0 0.0
  %1790 = vmatprep.subr.mxu0 0.0
  %1791 = vmatpush2.msra.mxu0 0.0
  %1792 = vmatprep.subr.mxu0 0.0
  %1793 = vmatpush2.msra.mxu0 0.0
  %1794 = vmatprep.subr.mxu0 0.0
  %1795 = vmatpush2.msra.mxu0 0.0
  %1796 = vmatprep.subr.mxu0 0.0
  %1797 = vmatpush2.msra.mxu0 0.0
  %1798 = vmatprep.subr.mxu0 0.0
  %1799 = vmatpush2.msra.mxu0 0.0
  %1800 = vmatprep.subr.mxu0 0.0
  %1801 = vmatpush2.msra.mxu0 0.0
  %1802 = vmatprep.subr.mxu0 0.0
  %1803 = vmatpush2.msra.mxu0 0.0
  %1804 = vmatprep.subr.mxu0 0.0
  %1805 = vmatpush2.msra.mxu0 0.0
  %1806 = vmatprep.subr.mxu0 0.0
  %1807 = vmatpush2.msra.mxu0 0.0
  %1808 = vmatprep.subr.mxu0 0.0
  %1809 = vmatpush2.msra.mxu0 0.0
  %1810 = vmatprep.subr.mxu0 0.0
  %1811 = vmatpush2.msra.mxu0 0.0
  %1812 = vmatprep.subr.mxu0 0.0
  %1813 = vmatpush2.msra.mxu0 0.0
  %1814 = vmatprep.subr.mxu0 0.0
  %1815 = vmatpush2.msra.mxu0 0.0
  %1816 = vmatprep.subr.mxu0 0.0
  %1817 = vmatpush2.msra.mxu0 0.0
  %1818 = vmatprep.mubr.f32.mxu0 0.0
  %v1819 = vand.u32 %v25, 4294901760
  %v1820 = vsub.f32 %v25, %v1819
  %1821 = vmatmul.mubr.f32.gmra.mxu0 %v1820
  %v1822 = vpop.f32.mrf.mxu0
  %v1823 = vadd.f32 %v1739, %v1822
  %v1824 = vpop.f32.mrf.mxu0
  %v1825 = vadd.f32 %v1741, %v1824
  %1826 = vmatprep.mubr.f32.mxu0 0.0
  %v1827 = vand.u32 %v28, 4294901760
  %v1828 = vsub.f32 %v28, %v1827
  %1829 = vmatmul.mubr.f32.gmra.mxu0 %v1828
  %v1830 = vpop.f32.mrf.mxu0
  %v1831 = vadd.f32 %v1746, %v1830
  %v1832 = vpop.f32.mrf.mxu0
  %v1833 = vadd.f32 %v1748, %v1832
  %1834 = vdwg.mxu0
  %1835 = vmatprep.subr.mxu0 0.0
  %1836 = vmatpush1.msra.mxu0 0.0
  %1837 = vmatprep.subr.mxu0 0.0
  %1838 = vmatpush1.msra.mxu0 0.0
  %1839 = vmatprep.subr.mxu0 0.0
  %1840 = vmatpush1.msra.mxu0 0.0
  %1841 = vmatprep.subr.mxu0 0.0
  %1842 = vmatpush1.msra.mxu0 0.0
  %1843 = vmatprep.subr.mxu0 0.0
  %1844 = vmatpush1.msra.mxu0 0.0
  %1845 = vmatprep.subr.mxu0 0.0
  %1846 = vmatpush1.msra.mxu0 0.0
  %1847 = vmatprep.subr.mxu0 0.0
  %1848 = vmatpush1.msra.mxu0 0.0
  %1849 = vmatprep.subr.mxu0 0.0
  %1850 = vmatpush1.msra.mxu0 0.0
  %1851 = vmatprep.subr.mxu0 0.0
  %1852 = vmatpush1.msra.mxu0 0.0
  %1853 = vmatprep.subr.mxu0 0.0
  %1854 = vmatpush1.msra.mxu0 0.0
  %1855 = vmatprep.subr.mxu0 0.0
  %1856 = vmatpush1.msra.mxu0 0.0
  %1857 = vmatprep.subr.mxu0 0.0
  %1858 = vmatpush1.msra.mxu0 0.0
  %1859 = vmatprep.subr.mxu0 0.0
  %1860 = vmatpush1.msra.mxu0 0.0
  %1861 = vmatprep.subr.mxu0 0.0
  %1862 = vmatpush1.msra.mxu0 0.0
  %1863 = vmatprep.subr.mxu0 0.0
  %1864 = vmatpush1.msra.mxu0 0.0
  %v1865 = vand.u32 %v20, 4294901760
  %1866 = vmatprep.subr.mxu0 %v1865
  %v1867 = vand.u32 %v19, 4294901760
  %1868 = vmatpush1.msra.mxu0 %v1867
  %1869 = vmatprep.subr.mxu0 0.0
  %1870 = vmatpush2.msra.mxu0 0.0
  %1871 = vmatprep.subr.mxu0 0.0
  %1872 = vmatpush2.msra.mxu0 0.0
  %1873 = vmatprep.subr.mxu0 0.0
  %1874 = vmatpush2.msra.mxu0 0.0
  %1875 = vmatprep.subr.mxu0 0.0
  %1876 = vmatpush2.msra.mxu0 0.0
  %1877 = vmatprep.subr.mxu0 0.0
  %1878 = vmatpush2.msra.mxu0 0.0
  %1879 = vmatprep.subr.mxu0 0.0
  %1880 = vmatpush2.msra.mxu0 0.0
  %1881 = vmatprep.subr.mxu0 0.0
  %1882 = vmatpush2.msra.mxu0 0.0
  %1883 = vmatprep.subr.mxu0 0.0
  %1884 = vmatpush2.msra.mxu0 0.0
  %1885 = vmatprep.subr.mxu0 0.0
  %1886 = vmatpush2.msra.mxu0 0.0
  %1887 = vmatprep.subr.mxu0 0.0
  %1888 = vmatpush2.msra.mxu0 0.0
  %1889 = vmatprep.subr.mxu0 0.0
  %1890 = vmatpush2.msra.mxu0 0.0
  %1891 = vmatprep.subr.mxu0 0.0
  %1892 = vmatpush2.msra.mxu0 0.0
  %1893 = vmatprep.subr.mxu0 0.0
  %1894 = vmatpush2.msra.mxu0 0.0
  %1895 = vmatprep.subr.mxu0 0.0
  %1896 = vmatpush2.msra.mxu0 0.0
  %1897 = vmatprep.subr.mxu0 0.0
  %1898 = vmatpush2.msra.mxu0 0.0
  %1899 = vmatprep.subr.mxu0 0.0
  %1900 = vmatpush2.msra.mxu0 0.0
  %1901 = vmatprep.mubr.f32.mxu0 0.0
  %v1902 = vand.u32 %v25, 4294901760
  %v1903 = vsub.f32 %v25, %v1902
  %v1904 = vand.u32 %v1903, 4294901760
  %1905 = vmatmul.mubr.f32.gmra.mxu0 %v1904
  %v1906 = vpop.f32.mrf.mxu0
  %v1907 = vadd.f32 %v1823, %v1906
  %v1908 = vpop.f32.mrf.mxu0
  %v1909 = vadd.f32 %v1825, %v1908
  %1910 = vmatprep.mubr.f32.mxu0 0.0
  %v1911 = vand.u32 %v28, 4294901760
  %v1912 = vsub.f32 %v28, %v1911
  %v1913 = vand.u32 %v1912, 4294901760
  %1914 = vmatmul.mubr.f32.gmra.mxu0 %v1913
  %v1915 = vpop.f32.mrf.mxu0
  %v1916 = vadd.f32 %v1831, %v1915
  %v1917 = vpop.f32.mrf.mxu0
  %v1918 = vadd.f32 %v1833, %v1917
  %1919 = vdwg.mxu0
  %1920 = vmatprep.subr.mxu0 0.0
  %1921 = vmatpush1.msra.mxu0 0.0
  %1922 = vmatprep.subr.mxu0 0.0
  %1923 = vmatpush1.msra.mxu0 0.0
  %1924 = vmatprep.subr.mxu0 0.0
  %1925 = vmatpush1.msra.mxu0 0.0
  %1926 = vmatprep.subr.mxu0 0.0
  %1927 = vmatpush1.msra.mxu0 0.0
  %1928 = vmatprep.subr.mxu0 0.0
  %1929 = vmatpush1.msra.mxu0 0.0
  %1930 = vmatprep.subr.mxu0 0.0
  %1931 = vmatpush1.msra.mxu0 0.0
  %1932 = vmatprep.subr.mxu0 0.0
  %1933 = vmatpush1.msra.mxu0 0.0
  %1934 = vmatprep.subr.mxu0 0.0
  %1935 = vmatpush1.msra.mxu0 0.0
  %1936 = vmatprep.subr.mxu0 0.0
  %1937 = vmatpush1.msra.mxu0 0.0
  %1938 = vmatprep.subr.mxu0 0.0
  %1939 = vmatpush1.msra.mxu0 0.0
  %1940 = vmatprep.subr.mxu0 0.0
  %1941 = vmatpush1.msra.mxu0 0.0
  %1942 = vmatprep.subr.mxu0 0.0
  %1943 = vmatpush1.msra.mxu0 0.0
  %1944 = vmatprep.subr.mxu0 0.0
  %1945 = vmatpush1.msra.mxu0 0.0
  %1946 = vmatprep.subr.mxu0 0.0
  %1947 = vmatpush1.msra.mxu0 0.0
  %1948 = vmatprep.subr.mxu0 0.0
  %1949 = vmatpush1.msra.mxu0 0.0
  %v1950 = vand.u32 %v20, 4294901760
  %v1951 = vsub.f32 %v20, %v1950
  %v1952 = vand.u32 %v1951, 4294901760
  %1953 = vmatprep.subr.mxu0 %v1952
  %v1954 = vand.u32 %v19, 4294901760
  %v1955 = vsub.f32 %v19, %v1954
  %v1956 = vand.u32 %v1955, 4294901760
  %1957 = vmatpush1.msra.mxu0 %v1956
  %1958 = vmatprep.subr.mxu0 0.0
  %1959 = vmatpush2.msra.mxu0 0.0
  %1960 = vmatprep.subr.mxu0 0.0
  %1961 = vmatpush2.msra.mxu0 0.0
  %1962 = vmatprep.subr.mxu0 0.0
  %1963 = vmatpush2.msra.mxu0 0.0
  %1964 = vmatprep.subr.mxu0 0.0
  %1965 = vmatpush2.msra.mxu0 0.0
  %1966 = vmatprep.subr.mxu0 0.0
  %1967 = vmatpush2.msra.mxu0 0.0
  %1968 = vmatprep.subr.mxu0 0.0
  %1969 = vmatpush2.msra.mxu0 0.0
  %1970 = vmatprep.subr.mxu0 0.0
  %1971 = vmatpush2.msra.mxu0 0.0
  %1972 = vmatprep.subr.mxu0 0.0
  %1973 = vmatpush2.msra.mxu0 0.0
  %1974 = vmatprep.subr.mxu0 0.0
  %1975 = vmatpush2.msra.mxu0 0.0
  %1976 = vmatprep.subr.mxu0 0.0
  %1977 = vmatpush2.msra.mxu0 0.0
  %1978 = vmatprep.subr.mxu0 0.0
  %1979 = vmatpush2.msra.mxu0 0.0
  %1980 = vmatprep.subr.mxu0 0.0
  %1981 = vmatpush2.msra.mxu0 0.0
  %1982 = vmatprep.subr.mxu0 0.0
  %1983 = vmatpush2.msra.mxu0 0.0
  %1984 = vmatprep.subr.mxu0 0.0
  %1985 = vmatpush2.msra.mxu0 0.0
  %1986 = vmatprep.subr.mxu0 0.0
  %1987 = vmatpush2.msra.mxu0 0.0
  %1988 = vmatprep.subr.mxu0 0.0
  %1989 = vmatpush2.msra.mxu0 0.0
  %1990 = vmatprep.mubr.f32.mxu0 0.0
  %v1991 = vand.u32 %v25, 4294901760
  %1992 = vmatmul.mubr.f32.gmra.mxu0 %v1991
  %v1993 = vpop.f32.mrf.mxu0
  %v1994 = vadd.f32 %v1907, %v1993
  %v1995 = vpop.f32.mrf.mxu0
  %v1996 = vadd.f32 %v1909, %v1995
  %1997 = vmatprep.mubr.f32.mxu0 0.0
  %v1998 = vand.u32 %v28, 4294901760
  %1999 = vmatmul.mubr.f32.gmra.mxu0 %v1998
  %v2000 = vpop.f32.mrf.mxu0
  %v2001 = vadd.f32 %v1916, %v2000
  %v2002 = vpop.f32.mrf.mxu0
  %v2003 = vadd.f32 %v1918, %v2002
  %2004 = vdwg.mxu0
  %2005 = vmatprep.subr.mxu0 0.0
  %2006 = vmatpush1.msra.mxu0 0.0
  %2007 = vmatprep.subr.mxu0 0.0
  %2008 = vmatpush1.msra.mxu0 0.0
  %2009 = vmatprep.subr.mxu0 0.0
  %2010 = vmatpush1.msra.mxu0 0.0
  %2011 = vmatprep.subr.mxu0 0.0
  %2012 = vmatpush1.msra.mxu0 0.0
  %2013 = vmatprep.subr.mxu0 0.0
  %2014 = vmatpush1.msra.mxu0 0.0
  %2015 = vmatprep.subr.mxu0 0.0
  %2016 = vmatpush1.msra.mxu0 0.0
  %2017 = vmatprep.subr.mxu0 0.0
  %2018 = vmatpush1.msra.mxu0 0.0
  %2019 = vmatprep.subr.mxu0 0.0
  %2020 = vmatpush1.msra.mxu0 0.0
  %2021 = vmatprep.subr.mxu0 0.0
  %2022 = vmatpush1.msra.mxu0 0.0
  %2023 = vmatprep.subr.mxu0 0.0
  %2024 = vmatpush1.msra.mxu0 0.0
  %2025 = vmatprep.subr.mxu0 0.0
  %2026 = vmatpush1.msra.mxu0 0.0
  %2027 = vmatprep.subr.mxu0 0.0
  %2028 = vmatpush1.msra.mxu0 0.0
  %2029 = vmatprep.subr.mxu0 0.0
  %2030 = vmatpush1.msra.mxu0 0.0
  %2031 = vmatprep.subr.mxu0 0.0
  %2032 = vmatpush1.msra.mxu0 0.0
  %2033 = vmatprep.subr.mxu0 0.0
  %2034 = vmatpush1.msra.mxu0 0.0
  %v2035 = vand.u32 %v20, 4294901760
  %2036 = vmatprep.subr.mxu0 %v2035
  %v2037 = vand.u32 %v19, 4294901760
  %2038 = vmatpush1.msra.mxu0 %v2037
  %2039 = vmatprep.subr.mxu0 0.0
  %2040 = vmatpush2.msra.mxu0 0.0
  %2041 = vmatprep.subr.mxu0 0.0
  %2042 = vmatpush2.msra.mxu0 0.0
  %2043 = vmatprep.subr.mxu0 0.0
  %2044 = vmatpush2.msra.mxu0 0.0
  %2045 = vmatprep.subr.mxu0 0.0
  %2046 = vmatpush2.msra.mxu0 0.0
  %2047 = vmatprep.subr.mxu0 0.0
  %2048 = vmatpush2.msra.mxu0 0.0
  %2049 = vmatprep.subr.mxu0 0.0
  %2050 = vmatpush2.msra.mxu0 0.0
  %2051 = vmatprep.subr.mxu0 0.0
  %2052 = vmatpush2.msra.mxu0 0.0
  %2053 = vmatprep.subr.mxu0 0.0
  %2054 = vmatpush2.msra.mxu0 0.0
  %2055 = vmatprep.subr.mxu0 0.0
  %2056 = vmatpush2.msra.mxu0 0.0
  %2057 = vmatprep.subr.mxu0 0.0
  %2058 = vmatpush2.msra.mxu0 0.0
  %2059 = vmatprep.subr.mxu0 0.0
  %2060 = vmatpush2.msra.mxu0 0.0
  %2061 = vmatprep.subr.mxu0 0.0
  %2062 = vmatpush2.msra.mxu0 0.0
  %2063 = vmatprep.subr.mxu0 0.0
  %2064 = vmatpush2.msra.mxu0 0.0
  %2065 = vmatprep.subr.mxu0 0.0
  %2066 = vmatpush2.msra.mxu0 0.0
  %2067 = vmatprep.subr.mxu0 0.0
  %2068 = vmatpush2.msra.mxu0 0.0
  %2069 = vmatprep.subr.mxu0 0.0
  %2070 = vmatpush2.msra.mxu0 0.0
  %2071 = vmatprep.mubr.f32.mxu0 0.0
  %v2072 = vand.u32 %v25, 4294901760
  %2073 = vmatmul.mubr.f32.gmra.mxu0 %v2072
  %v2074 = vpop.f32.mrf.mxu0
  %v2075 = vadd.f32 %v1994, %v2074
  %v2076 = vpop.f32.mrf.mxu0
  %v2077 = vadd.f32 %v1996, %v2076
  %2078 = vmatprep.mubr.f32.mxu0 0.0
  %v2079 = vand.u32 %v28, 4294901760
  %2080 = vmatmul.mubr.f32.gmra.mxu0 %v2079
  %v2081 = vpop.f32.mrf.mxu0
  %v2082 = vadd.f32 %v2001, %v2081
  %v2083 = vpop.f32.mrf.mxu0
  %v2084 = vadd.f32 %v2003, %v2083
  %2085 = vdwg.mxu0
  %2086 = vmatprep.subr.mxu0 0.0
  %2087 = vmatpush1.msra.mxu0 0.0
  %2088 = vmatprep.subr.mxu0 0.0
  %2089 = vmatpush1.msra.mxu0 0.0
  %2090 = vmatprep.subr.mxu0 0.0
  %2091 = vmatpush1.msra.mxu0 0.0
  %2092 = vmatprep.subr.mxu0 0.0
  %2093 = vmatpush1.msra.mxu0 0.0
  %2094 = vmatprep.subr.mxu0 0.0
  %2095 = vmatpush1.msra.mxu0 0.0
  %2096 = vmatprep.subr.mxu0 0.0
  %2097 = vmatpush1.msra.mxu0 0.0
  %2098 = vmatprep.subr.mxu0 0.0
  %2099 = vmatpush1.msra.mxu0 0.0
  %2100 = vmatprep.subr.mxu0 0.0
  %2101 = vmatpush1.msra.mxu0 0.0
  %2102 = vmatprep.subr.mxu0 0.0
  %2103 = vmatpush1.msra.mxu0 0.0
  %2104 = vmatprep.subr.mxu0 0.0
  %2105 = vmatpush1.msra.mxu0 0.0
  %2106 = vmatprep.subr.mxu0 0.0
  %2107 = vmatpush1.msra.mxu0 0.0
  %2108 = vmatprep.subr.mxu0 0.0
  %2109 = vmatpush1.msra.mxu0 0.0
  %2110 = vmatprep.subr.mxu0 0.0
  %2111 = vmatpush1.msra.mxu0 0.0
  %2112 = vmatprep.subr.mxu0 0.0
  %2113 = vmatpush1.msra.mxu0 0.0
  %2114 = vmatprep.subr.mxu0 0.0
  %2115 = vmatpush1.msra.mxu0 0.0
  %v2116 = vand.u32 %v22, 4294901760
  %2117 = vmatprep.subr.mxu0 %v2116
  %v2118 = vand.u32 %v21, 4294901760
  %2119 = vmatpush1.msra.mxu0 %v2118
  %2120 = vmatprep.subr.mxu0 0.0
  %2121 = vmatpush2.msra.mxu0 0.0
  %2122 = vmatprep.subr.mxu0 0.0
  %2123 = vmatpush2.msra.mxu0 0.0
  %2124 = vmatprep.subr.mxu0 0.0
  %2125 = vmatpush2.msra.mxu0 0.0
  %2126 = vmatprep.subr.mxu0 0.0
  %2127 = vmatpush2.msra.mxu0 0.0
  %2128 = vmatprep.subr.mxu0 0.0
  %2129 = vmatpush2.msra.mxu0 0.0
  %2130 = vmatprep.subr.mxu0 0.0
  %2131 = vmatpush2.msra.mxu0 0.0
  %2132 = vmatprep.subr.mxu0 0.0
  %2133 = vmatpush2.msra.mxu0 0.0
  %2134 = vmatprep.subr.mxu0 0.0
  %2135 = vmatpush2.msra.mxu0 0.0
  %2136 = vmatprep.subr.mxu0 0.0
  %2137 = vmatpush2.msra.mxu0 0.0
  %2138 = vmatprep.subr.mxu0 0.0
  %2139 = vmatpush2.msra.mxu0 0.0
  %2140 = vmatprep.subr.mxu0 0.0
  %2141 = vmatpush2.msra.mxu0 0.0
  %2142 = vmatprep.subr.mxu0 0.0
  %2143 = vmatpush2.msra.mxu0 0.0
  %2144 = vmatprep.subr.mxu0 0.0
  %2145 = vmatpush2.msra.mxu0 0.0
  %2146 = vmatprep.subr.mxu0 0.0
  %2147 = vmatpush2.msra.mxu0 0.0
  %2148 = vmatprep.subr.mxu0 0.0
  %2149 = vmatpush2.msra.mxu0 0.0
  %2150 = vmatprep.subr.mxu0 0.0
  %2151 = vmatpush2.msra.mxu0 0.0
  %2152 = vmatprep.mubr.f32.mxu0 0.0
  %v2153 = vand.u32 %v25, 4294901760
  %v2154 = vsub.f32 %v25, %v2153
  %v2155 = vand.u32 %v2154, 4294901760
  %v2156 = vsub.f32 %v2154, %v2155
  %v2157 = vand.u32 %v2156, 4294901760
  %2158 = vmatmul.mubr.f32.gmra.mxu0 %v2157
  %v2159 = vpop.f32.mrf.mxu0
  %v2160 = vadd.f32 0.0, %v2159
  %v2161 = vpop.f32.mrf.mxu0
  %v2162 = vadd.f32 0.0, %v2161
  %2163 = vmatprep.mubr.f32.mxu0 0.0
  %v2164 = vand.u32 %v28, 4294901760
  %v2165 = vsub.f32 %v28, %v2164
  %v2166 = vand.u32 %v2165, 4294901760
  %v2167 = vsub.f32 %v2165, %v2166
  %v2168 = vand.u32 %v2167, 4294901760
  %2169 = vmatmul.mubr.f32.gmra.mxu0 %v2168
  %v2170 = vpop.f32.mrf.mxu0
  %v2171 = vadd.f32 0.0, %v2170
  %v2172 = vpop.f32.mrf.mxu0
  %v2173 = vadd.f32 0.0, %v2172
  %2174 = vdwg.mxu0
  %2175 = vmatprep.subr.mxu0 0.0
  %2176 = vmatpush1.msra.mxu0 0.0
  %2177 = vmatprep.subr.mxu0 0.0
  %2178 = vmatpush1.msra.mxu0 0.0
  %2179 = vmatprep.subr.mxu0 0.0
  %2180 = vmatpush1.msra.mxu0 0.0
  %2181 = vmatprep.subr.mxu0 0.0
  %2182 = vmatpush1.msra.mxu0 0.0
  %2183 = vmatprep.subr.mxu0 0.0
  %2184 = vmatpush1.msra.mxu0 0.0
  %2185 = vmatprep.subr.mxu0 0.0
  %2186 = vmatpush1.msra.mxu0 0.0
  %2187 = vmatprep.subr.mxu0 0.0
  %2188 = vmatpush1.msra.mxu0 0.0
  %2189 = vmatprep.subr.mxu0 0.0
  %2190 = vmatpush1.msra.mxu0 0.0
  %2191 = vmatprep.subr.mxu0 0.0
  %2192 = vmatpush1.msra.mxu0 0.0
  %2193 = vmatprep.subr.mxu0 0.0
  %2194 = vmatpush1.msra.mxu0 0.0
  %2195 = vmatprep.subr.mxu0 0.0
  %2196 = vmatpush1.msra.mxu0 0.0
  %2197 = vmatprep.subr.mxu0 0.0
  %2198 = vmatpush1.msra.mxu0 0.0
  %2199 = vmatprep.subr.mxu0 0.0
  %2200 = vmatpush1.msra.mxu0 0.0
  %2201 = vmatprep.subr.mxu0 0.0
  %2202 = vmatpush1.msra.mxu0 0.0
  %2203 = vmatprep.subr.mxu0 0.0
  %2204 = vmatpush1.msra.mxu0 0.0
  %v2205 = vand.u32 %v22, 4294901760
  %v2206 = vsub.f32 %v22, %v2205
  %v2207 = vand.u32 %v2206, 4294901760
  %v2208 = vsub.f32 %v2206, %v2207
  %v2209 = vand.u32 %v2208, 4294901760
  %2210 = vmatprep.subr.mxu0 %v2209
  %v2211 = vand.u32 %v21, 4294901760
  %v2212 = vsub.f32 %v21, %v2211
  %v2213 = vand.u32 %v2212, 4294901760
  %v2214 = vsub.f32 %v2212, %v2213
  %v2215 = vand.u32 %v2214, 4294901760
  %2216 = vmatpush1.msra.mxu0 %v2215
  %2217 = vmatprep.subr.mxu0 0.0
  %2218 = vmatpush2.msra.mxu0 0.0
  %2219 = vmatprep.subr.mxu0 0.0
  %2220 = vmatpush2.msra.mxu0 0.0
  %2221 = vmatprep.subr.mxu0 0.0
  %2222 = vmatpush2.msra.mxu0 0.0
  %2223 = vmatprep.subr.mxu0 0.0
  %2224 = vmatpush2.msra.mxu0 0.0
  %2225 = vmatprep.subr.mxu0 0.0
  %2226 = vmatpush2.msra.mxu0 0.0
  %2227 = vmatprep.subr.mxu0 0.0
  %2228 = vmatpush2.msra.mxu0 0.0
  %2229 = vmatprep.subr.mxu0 0.0
  %2230 = vmatpush2.msra.mxu0 0.0
  %2231 = vmatprep.subr.mxu0 0.0
  %2232 = vmatpush2.msra.mxu0 0.0
  %2233 = vmatprep.subr.mxu0 0.0
  %2234 = vmatpush2.msra.mxu0 0.0
  %2235 = vmatprep.subr.mxu0 0.0
  %2236 = vmatpush2.msra.mxu0 0.0
  %2237 = vmatprep.subr.mxu0 0.0
  %2238 = vmatpush2.msra.mxu0 0.0
  %2239 = vmatprep.subr.mxu0 0.0
  %2240 = vmatpush2.msra.mxu0 0.0
  %2241 = vmatprep.subr.mxu0 0.0
  %2242 = vmatpush2.msra.mxu0 0.0
  %2243 = vmatprep.subr.mxu0 0.0
  %2244 = vmatpush2.msra.mxu0 0.0
  %2245 = vmatprep.subr.mxu0 0.0
  %2246 = vmatpush2.msra.mxu0 0.0
  %2247 = vmatprep.subr.mxu0 0.0
  %2248 = vmatpush2.msra.mxu0 0.0
  %2249 = vmatprep.mubr.f32.mxu0 0.0
  %v2250 = vand.u32 %v25, 4294901760
  %2251 = vmatmul.mubr.f32.gmra.mxu0 %v2250
  %v2252 = vpop.f32.mrf.mxu0
  %v2253 = vadd.f32 %v2160, %v2252
  %v2254 = vpop.f32.mrf.mxu0
  %v2255 = vadd.f32 %v2162, %v2254
  %2256 = vmatprep.mubr.f32.mxu0 0.0
  %v2257 = vand.u32 %v28, 4294901760
  %2258 = vmatmul.mubr.f32.gmra.mxu0 %v2257
  %v2259 = vpop.f32.mrf.mxu0
  %v2260 = vadd.f32 %v2171, %v2259
  %v2261 = vpop.f32.mrf.mxu0
  %v2262 = vadd.f32 %v2173, %v2261
  %2263 = vdwg.mxu0
  %2264 = vmatprep.subr.mxu0 0.0
  %2265 = vmatpush1.msra.mxu0 0.0
  %2266 = vmatprep.subr.mxu0 0.0
  %2267 = vmatpush1.msra.mxu0 0.0
  %2268 = vmatprep.subr.mxu0 0.0
  %2269 = vmatpush1.msra.mxu0 0.0
  %2270 = vmatprep.subr.mxu0 0.0
  %2271 = vmatpush1.msra.mxu0 0.0
  %2272 = vmatprep.subr.mxu0 0.0
  %2273 = vmatpush1.msra.mxu0 0.0
  %2274 = vmatprep.subr.mxu0 0.0
  %2275 = vmatpush1.msra.mxu0 0.0
  %2276 = vmatprep.subr.mxu0 0.0
  %2277 = vmatpush1.msra.mxu0 0.0
  %2278 = vmatprep.subr.mxu0 0.0
  %2279 = vmatpush1.msra.mxu0 0.0
  %2280 = vmatprep.subr.mxu0 0.0
  %2281 = vmatpush1.msra.mxu0 0.0
  %2282 = vmatprep.subr.mxu0 0.0
  %2283 = vmatpush1.msra.mxu0 0.0
  %2284 = vmatprep.subr.mxu0 0.0
  %2285 = vmatpush1.msra.mxu0 0.0
  %2286 = vmatprep.subr.mxu0 0.0
  %2287 = vmatpush1.msra.mxu0 0.0
  %2288 = vmatprep.subr.mxu0 0.0
  %2289 = vmatpush1.msra.mxu0 0.0
  %2290 = vmatprep.subr.mxu0 0.0
  %2291 = vmatpush1.msra.mxu0 0.0
  %2292 = vmatprep.subr.mxu0 0.0
  %2293 = vmatpush1.msra.mxu0 0.0
  %v2294 = vand.u32 %v22, 4294901760
  %v2295 = vsub.f32 %v22, %v2294
  %2296 = vmatprep.subr.mxu0 %v2295
  %v2297 = vand.u32 %v21, 4294901760
  %v2298 = vsub.f32 %v21, %v2297
  %2299 = vmatpush1.msra.mxu0 %v2298
  %2300 = vmatprep.subr.mxu0 0.0
  %2301 = vmatpush2.msra.mxu0 0.0
  %2302 = vmatprep.subr.mxu0 0.0
  %2303 = vmatpush2.msra.mxu0 0.0
  %2304 = vmatprep.subr.mxu0 0.0
  %2305 = vmatpush2.msra.mxu0 0.0
  %2306 = vmatprep.subr.mxu0 0.0
  %2307 = vmatpush2.msra.mxu0 0.0
  %2308 = vmatprep.subr.mxu0 0.0
  %2309 = vmatpush2.msra.mxu0 0.0
  %2310 = vmatprep.subr.mxu0 0.0
  %2311 = vmatpush2.msra.mxu0 0.0
  %2312 = vmatprep.subr.mxu0 0.0
  %2313 = vmatpush2.msra.mxu0 0.0
  %2314 = vmatprep.subr.mxu0 0.0
  %2315 = vmatpush2.msra.mxu0 0.0
  %2316 = vmatprep.subr.mxu0 0.0
  %2317 = vmatpush2.msra.mxu0 0.0
  %2318 = vmatprep.subr.mxu0 0.0
  %2319 = vmatpush2.msra.mxu0 0.0
  %2320 = vmatprep.subr.mxu0 0.0
  %2321 = vmatpush2.msra.mxu0 0.0
  %2322 = vmatprep.subr.mxu0 0.0
  %2323 = vmatpush2.msra.mxu0 0.0
  %2324 = vmatprep.subr.mxu0 0.0
  %2325 = vmatpush2.msra.mxu0 0.0
  %2326 = vmatprep.subr.mxu0 0.0
  %2327 = vmatpush2.msra.mxu0 0.0
  %2328 = vmatprep.subr.mxu0 0.0
  %2329 = vmatpush2.msra.mxu0 0.0
  %2330 = vmatprep.subr.mxu0 0.0
  %2331 = vmatpush2.msra.mxu0 0.0
  %2332 = vmatprep.mubr.f32.mxu0 0.0
  %v2333 = vand.u32 %v25, 4294901760
  %v2334 = vsub.f32 %v25, %v2333
  %2335 = vmatmul.mubr.f32.gmra.mxu0 %v2334
  %v2336 = vpop.f32.mrf.mxu0
  %v2337 = vadd.f32 %v2253, %v2336
  %v2338 = vpop.f32.mrf.mxu0
  %v2339 = vadd.f32 %v2255, %v2338
  %2340 = vmatprep.mubr.f32.mxu0 0.0
  %v2341 = vand.u32 %v28, 4294901760
  %v2342 = vsub.f32 %v28, %v2341
  %2343 = vmatmul.mubr.f32.gmra.mxu0 %v2342
  %v2344 = vpop.f32.mrf.mxu0
  %v2345 = vadd.f32 %v2260, %v2344
  %v2346 = vpop.f32.mrf.mxu0
  %v2347 = vadd.f32 %v2262, %v2346
  %2348 = vdwg.mxu0
  %2349 = vmatprep.subr.mxu0 0.0
  %2350 = vmatpush1.msra.mxu0 0.0
  %2351 = vmatprep.subr.mxu0 0.0
  %2352 = vmatpush1.msra.mxu0 0.0
  %2353 = vmatprep.subr.mxu0 0.0
  %2354 = vmatpush1.msra.mxu0 0.0
  %2355 = vmatprep.subr.mxu0 0.0
  %2356 = vmatpush1.msra.mxu0 0.0
  %2357 = vmatprep.subr.mxu0 0.0
  %2358 = vmatpush1.msra.mxu0 0.0
  %2359 = vmatprep.subr.mxu0 0.0
  %2360 = vmatpush1.msra.mxu0 0.0
  %2361 = vmatprep.subr.mxu0 0.0
  %2362 = vmatpush1.msra.mxu0 0.0
  %2363 = vmatprep.subr.mxu0 0.0
  %2364 = vmatpush1.msra.mxu0 0.0
  %2365 = vmatprep.subr.mxu0 0.0
  %2366 = vmatpush1.msra.mxu0 0.0
  %2367 = vmatprep.subr.mxu0 0.0
  %2368 = vmatpush1.msra.mxu0 0.0
  %2369 = vmatprep.subr.mxu0 0.0
  %2370 = vmatpush1.msra.mxu0 0.0
  %2371 = vmatprep.subr.mxu0 0.0
  %2372 = vmatpush1.msra.mxu0 0.0
  %2373 = vmatprep.subr.mxu0 0.0
  %2374 = vmatpush1.msra.mxu0 0.0
  %2375 = vmatprep.subr.mxu0 0.0
  %2376 = vmatpush1.msra.mxu0 0.0
  %2377 = vmatprep.subr.mxu0 0.0
  %2378 = vmatpush1.msra.mxu0 0.0
  %v2379 = vand.u32 %v22, 4294901760
  %2380 = vmatprep.subr.mxu0 %v2379
  %v2381 = vand.u32 %v21, 4294901760
  %2382 = vmatpush1.msra.mxu0 %v2381
  %2383 = vmatprep.subr.mxu0 0.0
  %2384 = vmatpush2.msra.mxu0 0.0
  %2385 = vmatprep.subr.mxu0 0.0
  %2386 = vmatpush2.msra.mxu0 0.0
  %2387 = vmatprep.subr.mxu0 0.0
  %2388 = vmatpush2.msra.mxu0 0.0
  %2389 = vmatprep.subr.mxu0 0.0
  %2390 = vmatpush2.msra.mxu0 0.0
  %2391 = vmatprep.subr.mxu0 0.0
  %2392 = vmatpush2.msra.mxu0 0.0
  %2393 = vmatprep.subr.mxu0 0.0
  %2394 = vmatpush2.msra.mxu0 0.0
  %2395 = vmatprep.subr.mxu0 0.0
  %2396 = vmatpush2.msra.mxu0 0.0
  %2397 = vmatprep.subr.mxu0 0.0
  %2398 = vmatpush2.msra.mxu0 0.0
  %2399 = vmatprep.subr.mxu0 0.0
  %2400 = vmatpush2.msra.mxu0 0.0
  %2401 = vmatprep.subr.mxu0 0.0
  %2402 = vmatpush2.msra.mxu0 0.0
  %2403 = vmatprep.subr.mxu0 0.0
  %2404 = vmatpush2.msra.mxu0 0.0
  %2405 = vmatprep.subr.mxu0 0.0
  %2406 = vmatpush2.msra.mxu0 0.0
  %2407 = vmatprep.subr.mxu0 0.0
  %2408 = vmatpush2.msra.mxu0 0.0
  %2409 = vmatprep.subr.mxu0 0.0
  %2410 = vmatpush2.msra.mxu0 0.0
  %2411 = vmatprep.subr.mxu0 0.0
  %2412 = vmatpush2.msra.mxu0 0.0
  %2413 = vmatprep.subr.mxu0 0.0
  %2414 = vmatpush2.msra.mxu0 0.0
  %2415 = vmatprep.mubr.f32.mxu0 0.0
  %v2416 = vand.u32 %v25, 4294901760
  %v2417 = vsub.f32 %v25, %v2416
  %v2418 = vand.u32 %v2417, 4294901760
  %2419 = vmatmul.mubr.f32.gmra.mxu0 %v2418
  %v2420 = vpop.f32.mrf.mxu0
  %v2421 = vadd.f32 %v2337, %v2420
  %v2422 = vpop.f32.mrf.mxu0
  %v2423 = vadd.f32 %v2339, %v2422
  %2424 = vmatprep.mubr.f32.mxu0 0.0
  %v2425 = vand.u32 %v28, 4294901760
  %v2426 = vsub.f32 %v28, %v2425
  %v2427 = vand.u32 %v2426, 4294901760
  %2428 = vmatmul.mubr.f32.gmra.mxu0 %v2427
  %v2429 = vpop.f32.mrf.mxu0
  %v2430 = vadd.f32 %v2345, %v2429
  %v2431 = vpop.f32.mrf.mxu0
  %v2432 = vadd.f32 %v2347, %v2431
  %2433 = vdwg.mxu0
  %2434 = vmatprep.subr.mxu0 0.0
  %2435 = vmatpush1.msra.mxu0 0.0
  %2436 = vmatprep.subr.mxu0 0.0
  %2437 = vmatpush1.msra.mxu0 0.0
  %2438 = vmatprep.subr.mxu0 0.0
  %2439 = vmatpush1.msra.mxu0 0.0
  %2440 = vmatprep.subr.mxu0 0.0
  %2441 = vmatpush1.msra.mxu0 0.0
  %2442 = vmatprep.subr.mxu0 0.0
  %2443 = vmatpush1.msra.mxu0 0.0
  %2444 = vmatprep.subr.mxu0 0.0
  %2445 = vmatpush1.msra.mxu0 0.0
  %2446 = vmatprep.subr.mxu0 0.0
  %2447 = vmatpush1.msra.mxu0 0.0
  %2448 = vmatprep.subr.mxu0 0.0
  %2449 = vmatpush1.msra.mxu0 0.0
  %2450 = vmatprep.subr.mxu0 0.0
  %2451 = vmatpush1.msra.mxu0 0.0
  %2452 = vmatprep.subr.mxu0 0.0
  %2453 = vmatpush1.msra.mxu0 0.0
  %2454 = vmatprep.subr.mxu0 0.0
  %2455 = vmatpush1.msra.mxu0 0.0
  %2456 = vmatprep.subr.mxu0 0.0
  %2457 = vmatpush1.msra.mxu0 0.0
  %2458 = vmatprep.subr.mxu0 0.0
  %2459 = vmatpush1.msra.mxu0 0.0
  %2460 = vmatprep.subr.mxu0 0.0
  %2461 = vmatpush1.msra.mxu0 0.0
  %2462 = vmatprep.subr.mxu0 0.0
  %2463 = vmatpush1.msra.mxu0 0.0
  %v2464 = vand.u32 %v22, 4294901760
  %v2465 = vsub.f32 %v22, %v2464
  %v2466 = vand.u32 %v2465, 4294901760
  %2467 = vmatprep.subr.mxu0 %v2466
  %v2468 = vand.u32 %v21, 4294901760
  %v2469 = vsub.f32 %v21, %v2468
  %v2470 = vand.u32 %v2469, 4294901760
  %2471 = vmatpush1.msra.mxu0 %v2470
  %2472 = vmatprep.subr.mxu0 0.0
  %2473 = vmatpush2.msra.mxu0 0.0
  %2474 = vmatprep.subr.mxu0 0.0
  %2475 = vmatpush2.msra.mxu0 0.0
  %2476 = vmatprep.subr.mxu0 0.0
  %2477 = vmatpush2.msra.mxu0 0.0
  %2478 = vmatprep.subr.mxu0 0.0
  %2479 = vmatpush2.msra.mxu0 0.0
  %2480 = vmatprep.subr.mxu0 0.0
  %2481 = vmatpush2.msra.mxu0 0.0
  %2482 = vmatprep.subr.mxu0 0.0
  %2483 = vmatpush2.msra.mxu0 0.0
  %2484 = vmatprep.subr.mxu0 0.0
  %2485 = vmatpush2.msra.mxu0 0.0
  %2486 = vmatprep.subr.mxu0 0.0
  %2487 = vmatpush2.msra.mxu0 0.0
  %2488 = vmatprep.subr.mxu0 0.0
  %2489 = vmatpush2.msra.mxu0 0.0
  %2490 = vmatprep.subr.mxu0 0.0
  %2491 = vmatpush2.msra.mxu0 0.0
  %2492 = vmatprep.subr.mxu0 0.0
  %2493 = vmatpush2.msra.mxu0 0.0
  %2494 = vmatprep.subr.mxu0 0.0
  %2495 = vmatpush2.msra.mxu0 0.0
  %2496 = vmatprep.subr.mxu0 0.0
  %2497 = vmatpush2.msra.mxu0 0.0
  %2498 = vmatprep.subr.mxu0 0.0
  %2499 = vmatpush2.msra.mxu0 0.0
  %2500 = vmatprep.subr.mxu0 0.0
  %2501 = vmatpush2.msra.mxu0 0.0
  %2502 = vmatprep.subr.mxu0 0.0
  %2503 = vmatpush2.msra.mxu0 0.0
  %2504 = vmatprep.mubr.f32.mxu0 0.0
  %v2505 = vand.u32 %v25, 4294901760
  %2506 = vmatmul.mubr.f32.gmra.mxu0 %v2505
  %v2507 = vpop.f32.mrf.mxu0
  %v2508 = vadd.f32 %v2421, %v2507
  %v2509 = vpop.f32.mrf.mxu0
  %v2510 = vadd.f32 %v2423, %v2509
  %2511 = vmatprep.mubr.f32.mxu0 0.0
  %v2512 = vand.u32 %v28, 4294901760
  %2513 = vmatmul.mubr.f32.gmra.mxu0 %v2512
  %v2514 = vpop.f32.mrf.mxu0
  %v2515 = vadd.f32 %v2430, %v2514
  %v2516 = vpop.f32.mrf.mxu0
  %v2517 = vadd.f32 %v2432, %v2516
  %2518 = vdwg.mxu0
  %2519 = vmatprep.subr.mxu0 0.0
  %2520 = vmatpush1.msra.mxu0 0.0
  %2521 = vmatprep.subr.mxu0 0.0
  %2522 = vmatpush1.msra.mxu0 0.0
  %2523 = vmatprep.subr.mxu0 0.0
  %2524 = vmatpush1.msra.mxu0 0.0
  %2525 = vmatprep.subr.mxu0 0.0
  %2526 = vmatpush1.msra.mxu0 0.0
  %2527 = vmatprep.subr.mxu0 0.0
  %2528 = vmatpush1.msra.mxu0 0.0
  %2529 = vmatprep.subr.mxu0 0.0
  %2530 = vmatpush1.msra.mxu0 0.0
  %2531 = vmatprep.subr.mxu0 0.0
  %2532 = vmatpush1.msra.mxu0 0.0
  %2533 = vmatprep.subr.mxu0 0.0
  %2534 = vmatpush1.msra.mxu0 0.0
  %2535 = vmatprep.subr.mxu0 0.0
  %2536 = vmatpush1.msra.mxu0 0.0
  %2537 = vmatprep.subr.mxu0 0.0
  %2538 = vmatpush1.msra.mxu0 0.0
  %2539 = vmatprep.subr.mxu0 0.0
  %2540 = vmatpush1.msra.mxu0 0.0
  %2541 = vmatprep.subr.mxu0 0.0
  %2542 = vmatpush1.msra.mxu0 0.0
  %2543 = vmatprep.subr.mxu0 0.0
  %2544 = vmatpush1.msra.mxu0 0.0
  %2545 = vmatprep.subr.mxu0 0.0
  %2546 = vmatpush1.msra.mxu0 0.0
  %2547 = vmatprep.subr.mxu0 0.0
  %2548 = vmatpush1.msra.mxu0 0.0
  %v2549 = vand.u32 %v22, 4294901760
  %2550 = vmatprep.subr.mxu0 %v2549
  %v2551 = vand.u32 %v21, 4294901760
  %2552 = vmatpush1.msra.mxu0 %v2551
  %2553 = vmatprep.subr.mxu0 0.0
  %2554 = vmatpush2.msra.mxu0 0.0
  %2555 = vmatprep.subr.mxu0 0.0
  %2556 = vmatpush2.msra.mxu0 0.0
  %2557 = vmatprep.subr.mxu0 0.0
  %2558 = vmatpush2.msra.mxu0 0.0
  %2559 = vmatprep.subr.mxu0 0.0
  %2560 = vmatpush2.msra.mxu0 0.0
  %2561 = vmatprep.subr.mxu0 0.0
  %2562 = vmatpush2.msra.mxu0 0.0
  %2563 = vmatprep.subr.mxu0 0.0
  %2564 = vmatpush2.msra.mxu0 0.0
  %2565 = vmatprep.subr.mxu0 0.0
  %2566 = vmatpush2.msra.mxu0 0.0
  %2567 = vmatprep.subr.mxu0 0.0
  %2568 = vmatpush2.msra.mxu0 0.0
  %2569 = vmatprep.subr.mxu0 0.0
  %2570 = vmatpush2.msra.mxu0 0.0
  %2571 = vmatprep.subr.mxu0 0.0
  %2572 = vmatpush2.msra.mxu0 0.0
  %2573 = vmatprep.subr.mxu0 0.0
  %2574 = vmatpush2.msra.mxu0 0.0
  %2575 = vmatprep.subr.mxu0 0.0
  %2576 = vmatpush2.msra.mxu0 0.0
  %2577 = vmatprep.subr.mxu0 0.0
  %2578 = vmatpush2.msra.mxu0 0.0
  %2579 = vmatprep.subr.mxu0 0.0
  %2580 = vmatpush2.msra.mxu0 0.0
  %2581 = vmatprep.subr.mxu0 0.0
  %2582 = vmatpush2.msra.mxu0 0.0
  %2583 = vmatprep.subr.mxu0 0.0
  %2584 = vmatpush2.msra.mxu0 0.0
  %2585 = vmatprep.mubr.f32.mxu0 0.0
  %v2586 = vand.u32 %v25, 4294901760
  %2587 = vmatmul.mubr.f32.gmra.mxu0 %v2586
  %v2588 = vpop.f32.mrf.mxu0
  %v2589 = vadd.f32 %v2508, %v2588
  %v2590 = vpop.f32.mrf.mxu0
  %v2591 = vadd.f32 %v2510, %v2590
  %2592 = vmatprep.mubr.f32.mxu0 0.0
  %v2593 = vand.u32 %v28, 4294901760
  %2594 = vmatmul.mubr.f32.gmra.mxu0 %v2593
  %v2595 = vpop.f32.mrf.mxu0
  %v2596 = vadd.f32 %v2515, %v2595
  %v2597 = vpop.f32.mrf.mxu0
  %v2598 = vadd.f32 %v2517, %v2597
  %2599 = vdwg.mxu0
  %v2600 = vmul.f32 %v533, 0.5
  %v2601 = vmul.f32 %v535, 0.5
  %v2602 = vmul.f32 %v1047, 0.5
  %v2603 = vmul.f32 %v1049, 0.5
  %v2604 = vmul.f32 %v1561, 0.5
  %v2605 = vmul.f32 %v1563, 0.5
  %v2606 = vmul.f32 %v2075, 0.5
  %v2607 = vmul.f32 %v2077, 0.5
  %v2608 = vmul.f32 %v2589, 0.5
  %v2609 = vmul.f32 %v2591, 0.5
  %v2610 = vmul.f32 %v540, 0.5
  %v2611 = vmul.f32 %v542, 0.5
  %v2612 = vmul.f32 %v1054, 0.5
  %v2613 = vmul.f32 %v1056, 0.5
  %v2614 = vmul.f32 %v1568, 0.5
  %v2615 = vmul.f32 %v1570, 0.5
  %v2616 = vmul.f32 %v2082, 0.5
  %v2617 = vmul.f32 %v2084, 0.5
  %v2618 = vmul.f32 %v2596, 0.5
  %v2619 = vmul.f32 %v2598, 0.5
  %v2620 = vmul.f32 %v533, 0.70710677
  %v2621 = vmul.f32 %v535, 0.70710677
  %v2622 = vmul.f32 %v1047, 0.70710677
  %v2623 = vmul.f32 %v1049, 0.70710677
  %v2624 = vmul.f32 %v1561, 0.70710677
  %v2625 = vmul.f32 %v1563, 0.70710677
  %v2626 = vmul.f32 %v2075, 0.70710677
  %v2627 = vmul.f32 %v2077, 0.70710677
  %v2628 = vmul.f32 %v2589, 0.70710677
  %v2629 = vmul.f32 %v2591, 0.70710677
  %v2630 = vmul.f32 %v540, 0.70710677
  %v2631 = vmul.f32 %v542, 0.70710677
  %v2632 = vmul.f32 %v1054, 0.70710677
  %v2633 = vmul.f32 %v1056, 0.70710677
  %v2634 = vmul.f32 %v1568, 0.70710677
  %v2635 = vmul.f32 %v1570, 0.70710677
  %v2636 = vmul.f32 %v2082, 0.70710677
  %v2637 = vmul.f32 %v2084, 0.70710677
  %v2638 = vmul.f32 %v2596, 0.70710677
  %v2639 = vmul.f32 %v2598, 0.70710677
  %v2640 = verf.f32.pop %v2620
  %v2641 = verf.f32.pop %v2621
  %v2642 = verf.f32.pop %v2622
  %v2643 = verf.f32.pop %v2623
  %v2644 = verf.f32.pop %v2624
  %v2645 = verf.f32.pop %v2625
  %v2646 = verf.f32.pop %v2626
  %v2647 = verf.f32.pop %v2627
  %v2648 = verf.f32.pop %v2628
  %v2649 = verf.f32.pop %v2629
  %v2650 = verf.f32.pop %v2630
  %v2651 = verf.f32.pop %v2631
  %v2652 = verf.f32.pop %v2632
  %v2653 = verf.f32.pop %v2633
  %v2654 = verf.f32.pop %v2634
  %v2655 = verf.f32.pop %v2635
  %v2656 = verf.f32.pop %v2636
  %v2657 = verf.f32.pop %v2637
  %v2658 = verf.f32.pop %v2638
  %v2659 = verf.f32.pop %v2639
  %v2660 = vadd.f32 %v2640, 1.0
  %v2661 = vadd.f32 %v2641, 1.0
  %v2662 = vadd.f32 %v2642, 1.0
  %v2663 = vadd.f32 %v2643, 1.0
  %v2664 = vadd.f32 %v2644, 1.0
  %v2665 = vadd.f32 %v2645, 1.0
  %v2666 = vadd.f32 %v2646, 1.0
  %v2667 = vadd.f32 %v2647, 1.0
  %v2668 = vadd.f32 %v2648, 1.0
  %v2669 = vadd.f32 %v2649, 1.0
  %v2670 = vadd.f32 %v2650, 1.0
  %v2671 = vadd.f32 %v2651, 1.0
  %v2672 = vadd.f32 %v2652, 1.0
  %v2673 = vadd.f32 %v2653, 1.0
  %v2674 = vadd.f32 %v2654, 1.0
  %v2675 = vadd.f32 %v2655, 1.0
  %v2676 = vadd.f32 %v2656, 1.0
  %v2677 = vadd.f32 %v2657, 1.0
  %v2678 = vadd.f32 %v2658, 1.0
  %v2679 = vadd.f32 %v2659, 1.0
  %v2680 = vmul.f32 %v2600, %v2660
  %v2681 = vmul.f32 %v2601, %v2661
  %v2682 = vmul.f32 %v2602, %v2662
  %v2683 = vmul.f32 %v2603, %v2663
  %v2684 = vmul.f32 %v2604, %v2664
  %v2685 = vmul.f32 %v2605, %v2665
  %v2686 = vmul.f32 %v2606, %v2666
  %v2687 = vmul.f32 %v2607, %v2667
  %v2688 = vmul.f32 %v2608, %v2668
  %v2689 = vmul.f32 %v2609, %v2669
  %v2690 = vmul.f32 %v2610, %v2670
  %v2691 = vmul.f32 %v2611, %v2671
  %v2692 = vmul.f32 %v2612, %v2672
  %v2693 = vmul.f32 %v2613, %v2673
  %v2694 = vmul.f32 %v2614, %v2674
  %v2695 = vmul.f32 %v2615, %v2675
  %v2696 = vmul.f32 %v2616, %v2676
  %v2697 = vmul.f32 %v2617, %v2677
  %v2698 = vmul.f32 %v2618, %v2678
  %v2699 = vmul.f32 %v2619, %v2679
  %2700 = vst [vmem:[%s2] sm:$0xff] %v2680
  %2701 = vst [vmem:[%s2 + $0x8] sm:$0xff] %v2681
  %2702 = vst [vmem:[%s2 + $0x10] sm:$0xff] %v2682
  %2703 = vst [vmem:[%s2 + $0x18] sm:$0xff] %v2683
  %2704 = vst [vmem:[%s2 + $0x20] sm:$0xff] %v2684
  %2705 = vst [vmem:[%s2 + $0x28] sm:$0xff] %v2685
  %2706 = vst [vmem:[%s2 + $0x30] sm:$0xff] %v2686
  %2707 = vst [vmem:[%s2 + $0x38] sm:$0xff] %v2687
  %2708 = vst [vmem:[%s2 + $0x40] sm:$0xff] %v2688
  %vm2709 = vcmask 31744
  %2710 = vst.msk [vmem:[%s2 + $0x48] sm:$0xff] %vm2709, %v2689
  %2711 = vst [vmem:[%s2 + $0x50] sm:$0x3] %v2690
  %2712 = vst [vmem:[%s2 + $0x58] sm:$0x3] %v2691
  %2713 = vst [vmem:[%s2 + $0x60] sm:$0x3] %v2692
  %2714 = vst [vmem:[%s2 + $0x68] sm:$0x3] %v2693
  %2715 = vst [vmem:[%s2 + $0x70] sm:$0x3] %v2694
  %2716 = vst [vmem:[%s2 + $0x78] sm:$0x3] %v2695
  %2717 = vst [vmem:[%s2 + $0x80] sm:$0x3] %v2696
  %2718 = vst [vmem:[%s2 + $0x88] sm:$0x3] %v2697
  %2719 = vst [vmem:[%s2 + $0x90] sm:$0x3] %v2698
  %vm2720 = vcmask 25600
  %2721 = vst.msk [vmem:[%s2 + $0x98] sm:$0x3] %vm2720, %v2699
  // Predicated region
  $region10: #{model_forward.1} parent=0 // pred_check
    _
  $region11: #{model_forward.1} parent=0 // pred_check_branch
    %2723 = sbr.rel (0) target = $region13
  $region12: #{model_forward.1} parent=0 // pred_region
    _
  $region13: #{model_forward.1} parent=0 // pred_fallthru
    _
  // Predicated region
  $region14: #{model_forward.1} parent=0 // pred_check
    _
  $region15: #{model_forward.1} parent=0 // pred_check_branch
    %2725 = sbr.rel (0) target = $region17
  $region16: #{model_forward.1} parent=0 // pred_region
    _
  $region17: #{model_forward.1} parent=0 // pred_fallthru
    _

</llo_original>
